<compile_context>
chip_gen: v6e
topology: v6e:2x2x1
jax: 0.10.0
libtpu: 0.0.40
codegen_flags: <defaults>
</compile_context>

<pallas_src>
import functools
import math

import jax
import jax.numpy as jnp
from jax.experimental import pallas as pl
from jax.experimental.pallas import tpu as pltpu


# ----------------------------------------------------------------------------
# exact (erf-based) GELU, matching PyTorch nn.GELU's default.
# erf via Abramowitz & Stegun 7.1.26 (|err| <= 1.5e-7, i.e. f32-exact level)
# using only exp / mul / add / divide, so it lowers cleanly in Mosaic.
# ----------------------------------------------------------------------------
def _erf(x):
    p = 0.3275911
    a1, a2, a3, a4, a5 = (0.254829592, -0.284496736, 1.421413741,
                          -1.453152027, 1.061405429)
    ax = jnp.abs(x)
    # TODO(synk): if a bundle dump shows the VALU as the binding slot, move this
    # divide onto the EUP with pl.reciprocal(..., approx=True) (small accuracy cost).
    t = 1.0 / (1.0 + p * ax)
    poly = t * (a1 + t * (a2 + t * (a3 + t * (a4 + t * a5))))
    y = 1.0 - poly * jnp.exp(-ax * ax)
    return jnp.where(x >= 0.0, y, -y)


def _gelu_exact(x):
    return 0.5 * x * (1.0 + _erf(x * (1.0 / math.sqrt(2.0))))


# ----------------------------------------------------------------------------
# Fused Encoder kernel: one (batch_tile, layer) grid step = one Block applied to
# Bt batch elements.  The running activation lives in the f32 VMEM scratch xacc_ref.
# ----------------------------------------------------------------------------
def _encoder_kernel(x_ref, *refs, n_head, eps, save_attn, bt, seq):
    (ln1g_ref, ln1b_ref, wqkv_ref, bqkv_ref, wo_ref, bo_ref,
     ln2g_ref, ln2b_ref, w1_ref, b1_ref, w2_ref, b2_ref) = refs[:12]
    if save_attn:
        y_ref, attn_ref, xacc_ref = refs[12], refs[13], refs[14]
    else:
        y_ref, xacc_ref = refs[12], refs[13]
        attn_ref = None

    layer = pl.program_id(1)
    n_layers = pl.num_programs(1)
    R, D = xacc_ref.shape                    # R = bt * seq
    H = n_head
    dh = D // H

    # x enters VMEM from HBM only once per batch tile (layer 0); afterwards it
    # stays resident across the layer axis.
    @pl.when(layer == 0)
    def _():
        xacc_ref[...] = x_ref[...].astype(jnp.float32)

    x = xacc_ref[...]                        # [R, D] f32

    def layernorm(v, g, b):
        mu = jnp.mean(v, axis=-1, keepdims=True)
        var = jnp.mean((v - mu) ** 2, axis=-1, keepdims=True)
        return (v - mu) * jax.lax.rsqrt(var + eps) * g + b

    # ---------------- attention branch ----------------
    xn = layernorm(x, ln1g_ref[0], ln1b_ref[0])                          # [R, D]
    qkv = jnp.dot(xn.astype(jnp.bfloat16), wqkv_ref[0],
                  preferred_element_type=jnp.float32) + bqkv_ref[0]      # [R, 3D]
    # NOTE: 1/sqrt(dh) is folded into the q columns of wqkv / bqkv on the host.
    q = qkv[:, 0:D]
    k = qkv[:, D:2 * D]
    v = qkv[:, 2 * D:3 * D]

    def split_heads(t):                      # [bt*S, D] -> [bt*H, S, dh]
        t3 = t.reshape(bt, seq, D)
        th = jnp.stack([t3[:, :, h * dh:(h + 1) * dh] for h in range(H)], axis=1)
        return th.reshape(bt * H, seq, dh)

    qh = split_heads(q).astype(jnp.bfloat16)
    kh = split_heads(k).astype(jnp.bfloat16)
    vh = split_heads(v).astype(jnp.bfloat16)

    # single batched MXU contraction over all (batch, head) groups
    s = jnp.einsum('gqd,gkd->gqk', qh, kh,
                   preferred_element_type=jnp.float32)                   # [bt*H,S,S]
    s = s - jnp.max(s, axis=-1, keepdims=True)
    pexp = jnp.exp(s)
    pattn = pexp * pl.reciprocal(jnp.sum(pexp, axis=-1, keepdims=True),
                                 approx=True)                            # softmax

    if attn_ref is not None:
        attn_ref[0] = pattn.reshape(bt, H, seq, seq).astype(attn_ref.dtype)

    ctx_g = jnp.einsum('gqk,gkd->gqd', pattn.astype(jnp.bfloat16), vh,
                       preferred_element_type=jnp.float32)               # [bt*H,S,dh]
    ctx4 = ctx_g.reshape(bt, H, seq, dh)
    ctx = jnp.concatenate([ctx4[:, h] for h in range(H)], axis=-1)       # [bt,S,D]
    ctx = ctx.reshape(R, D)

    attn_out = jnp.dot(ctx.astype(jnp.bfloat16), wo_ref[0],
                       preferred_element_type=jnp.float32) + bo_ref[0]
    x1 = x + attn_out                                                    # residual 1
    # TODO(synk): drop / attn_drop are eval-mode identity (not applied).

    # ---------------- MLP branch ----------------
    xn2 = layernorm(x1, ln2g_ref[0], ln2b_ref[0])
    h1 = jnp.dot(xn2.astype(jnp.bfloat16), w1_ref[0],
                 preferred_element_type=jnp.float32) + b1_ref[0]         # [R, M]
    h1 = _gelu_exact(h1)                     # exact erf GELU = PyTorch nn.GELU
    h2 = jnp.dot(h1.astype(jnp.bfloat16), w2_ref[0],
                 preferred_element_type=jnp.float32) + b2_ref[0]         # [R, D]
    x2 = x1 + h2                                                         # residual 2

    xacc_ref[...] = x2

    # Output store only on the last layer: the y block is resident across the
    # layer axis, so earlier stores/casts would be pure store-slot filler.
    @pl.when(layer == n_layers - 1)
    def _():
        y_ref[...] = x2.astype(y_ref.dtype)


# ----------------------------------------------------------------------------
# Wrapper
# ----------------------------------------------------------------------------
def _nbytes(shape, dtype):
    return math.prod(int(d) for d in shape) * jnp.dtype(dtype).itemsize


def _physical_vmem_bytes():
    try:
        return int(pltpu.get_tpu_info().vmem_capacity_bytes)
    except Exception:
        return 64 << 20          # conservative fallback (v7x per-TensorCore)


def _pick_batch_tile(batch):
    # Largest divisor of B that still leaves >= 2 entries on the batch grid axis
    # (so v7x's two TensorCores are both used), capped at 8 to bound VMEM.
    max_bt = max(1, batch // 2)
    bt = 1
    for cand in range(1, min(max_bt, 8) + 1):
        if batch % cand == 0:
            bt = cand
    return bt


def encoder_forward(x, stacked, *, n_head, eps, is_visualize, bt=None,
                    attn_dtype=None):
    """Matches Encoder.forward: returns (x_out, list of per-layer attn weights)."""
    B, S, D = x.shape
    L = stacked["wqkv"].shape[0]
    mlp_dim = stacked["w1"].shape[-1]
    H = n_head

    if bt is None:
        bt = _pick_batch_tile(B)
    assert B % bt == 0, f"batch {B} must be divisible by batch tile {bt}"
    nb = B // bt
    if attn_dtype is None:
        attn_dtype = x.dtype      # bf16 here halves attention-map HBM writeback

    kernel = functools.partial(_encoder_kernel, n_head=n_head, eps=float(eps),
                               save_attn=is_visualize, bt=bt, seq=S)

    def wspec(shape):
        n_rest = len(shape) - 1
        return pl.BlockSpec((1,) + tuple(shape[1:]),
                            lambda b, l, _n=n_rest: (l,) + (0,) * _n)

    in_arrays = (x.reshape(B * S, D),
                 stacked["ln1_g"], stacked["ln1_b"], stacked["wqkv"],
                 stacked["bqkv"], stacked["wo"], stacked["bo"],
                 stacked["ln2_g"], stacked["ln2_b"],
                 stacked["w1"], stacked["b1"], stacked["w2"], stacked["b2"])
    in_specs = [pl.BlockSpec((bt * S, D), lambda b, l: (b, 0))] + \
               [wspec(a.shape) for a in in_arrays[1:]]

    y_shape = jax.ShapeDtypeStruct((B * S, D), x.dtype)
    y_spec = pl.BlockSpec((bt * S, D), lambda b, l: (b, 0))
    if is_visualize:
        attn_shape = jax.ShapeDtypeStruct((L, B, H, S, S), attn_dtype)
        attn_spec = pl.BlockSpec((1, bt, H, S, S),
                                 lambda b, l: (l, b, 0, 0, 0))
        out_shape = (y_shape, attn_shape)
        out_specs = (y_spec, attn_spec)
    else:
        out_shape = y_shape
        out_specs = y_spec

    # --- explicit, generation-aware VMEM budget --------------------------------
    f32 = 4
    xbytes = jnp.dtype(x.dtype).itemsize
    vmem_need = bt * S * D * f32                                # xacc scratch
    vmem_need += 2 * 2 * bt * S * D * xbytes                    # x + y, 2 bufs each
    for a in in_arrays[1:]:                                     # weights, 2 bufs each
        vmem_need += 2 * _nbytes((1,) + tuple(a.shape[1:]), a.dtype)
    if is_visualize:
        vmem_need += 2 * bt * H * S * S * jnp.dtype(attn_dtype).itemsize
    # in-kernel f32 temporaries: qkv/q/k/v, scores+softmax, ctx/xn/residuals, MLP hidden
    vmem_need += f32 * (2 * bt * S * 3 * D
                        + 3 * bt * H * S * S
                        + 6 * bt * S * D
                        + 2 * bt * S * mlp_dim)
    cap = int(0.85 * _physical_vmem_bytes())   # ~108 MiB on v5e/v6e, ~54 MiB on v7x
    vmem_limit = int(min(max(int(1.25 * vmem_need) + (8 << 20), 32 << 20), cap))
    # TODO(synk): for HBM-latency-jitter-bound cases (v5e) add
    #             pipeline_mode=pl.Buffered(3) on the wqkv/w1/w2 specs.

    result = pl.pallas_call(
        kernel,
        out_shape=out_shape,
        grid=(nb, L),
        in_specs=in_specs,
        out_specs=out_specs,
        scratch_shapes=[pltpu.VMEM((bt * S, D), jnp.float32)],
        compiler_params=pltpu.CompilerParams(
            dimension_semantics=("parallel", "arbitrary"),
            vmem_limit_bytes=vmem_limit),
    )(*in_arrays)

    if is_visualize:
        y2d, attn = result
        y = y2d.reshape(B, S, D)
        return y, [attn[i].astype(jnp.float32) for i in range(L)]
    return result.reshape(B, S, D), []


# ----------------------------------------------------------------------------
# Deterministic parameter construction (shapes implied by Block/__init__).
# ----------------------------------------------------------------------------
def init_encoder_params(key, *, dim, n_layer, mlp_dim):
    params = []
    for i in range(n_layer):
        k = jax.random.fold_in(key, i)
        ks = jax.random.split(k, 4)
        params.append({
            "ln1_g": jnp.ones((1, dim), jnp.float32),
            "ln1_b": jnp.zeros((1, dim), jnp.float32),
            "wqkv":  0.02 * jax.random.normal(ks[0], (dim, 3 * dim), jnp.float32),
            "bqkv":  jnp.zeros((1, 3 * dim), jnp.float32),
            "wo":    0.02 * jax.random.normal(ks[1], (dim, dim), jnp.float32),
            "bo":    jnp.zeros((1, dim), jnp.float32),
            "ln2_g": jnp.ones((1, dim), jnp.float32),
            "ln2_b": jnp.zeros((1, dim), jnp.float32),
            "w1":    0.02 * jax.random.normal(ks[2], (dim, mlp_dim), jnp.float32),
            "b1":    jnp.zeros((1, mlp_dim), jnp.float32),
            "w2":    0.02 * jax.random.normal(ks[3], (mlp_dim, dim), jnp.float32),
            "b2":    jnp.zeros((1, dim), jnp.float32),
        })
    return params


def stack_layer_params(layer_params, *, n_head, weight_dtype=jnp.bfloat16):
    """Stack per-layer params along a leading layer axis; matmul weights -> bf16.

    The attention scale 1/sqrt(dh) is folded into the q columns of wqkv / bqkv
    (in f32, before the bf16 cast), so the kernel never multiplies q by it.
    """
    dim = layer_params[0]["wqkv"].shape[0]
    scale = 1.0 / math.sqrt(dim // n_head)
    wnames = ("wqkv", "wo", "w1", "w2")
    stacked = {}
    for name in layer_params[0]:
        a = jnp.stack([p[name] for p in layer_params], axis=0)
        if name in ("wqkv", "bqkv"):
            a = a.at[..., :dim].multiply(scale)      # fold 1/sqrt(dh) into q
        if name in wnames:
            a = a.astype(weight_dtype)
        stacked[name] = a
    return stacked


if __name__ == "__main__":
    # Small config consistent with Encoder(dim, n_layer, n_head, mlp_dim, ...).
    dim, n_layer, n_head, mlp_dim = 32, 2, 4, 64
    eps, is_visualize = 1e-6, True
    B, S = 2, 8

    key = jax.random.PRNGKey(0)
    kx, kp = jax.random.split(key)
    x = jax.random.normal(kx, (B, S, dim), jnp.float32)
    params = init_encoder_params(kp, dim=dim, n_layer=n_layer, mlp_dim=mlp_dim)
    stacked = stack_layer_params(params, n_head=n_head)

    y, attn_weights = encoder_forward(
        x, stacked, n_head=n_head, eps=eps, is_visualize=is_visualize)
    y = jax.block_until_ready(y)
    attn_weights = [jax.block_until_ready(w) for w in attn_weights]

    assert y.shape == (B, S, dim)
    assert len(attn_weights) == n_layer
    assert all(w.shape == (B, n_head, S, S) for w in attn_weights)
    assert bool(jnp.all(jnp.isfinite(y)))
    # softmax rows sum to ~1 (approx reciprocal -> loose tolerance)
    assert bool(jnp.allclose(jnp.sum(attn_weights[0], axis=-1), 1.0, atol=1e-2))

    # no-visualize fast path: attention maps are never computed or stored
    y2, attn2 = encoder_forward(x, stacked, n_head=n_head, eps=eps,
                                is_visualize=False)
    y2 = jax.block_until_ready(y2)
    assert y2.shape == (B, S, dim) and attn2 == []
    assert bool(jnp.allclose(y, y2, atol=1e-3, rtol=1e-3))

    print("KERNEL_OK")
</pallas_src>

<mosaic_0001>
module attributes {stable_mosaic.version = 11 : i64} {
  func.func @_encoder_kernel(%arg0: i32, %arg1: i32, %arg2: memref<8x32xf32, #tpu.memory_space<vmem>>, %arg3: memref<1x1x32xf32, #tpu.memory_space<vmem>>, %arg4: memref<1x1x32xf32, #tpu.memory_space<vmem>>, %arg5: memref<1x32x96xbf16, #tpu.memory_space<vmem>>, %arg6: memref<1x1x96xf32, #tpu.memory_space<vmem>>, %arg7: memref<1x32x32xbf16, #tpu.memory_space<vmem>>, %arg8: memref<1x1x32xf32, #tpu.memory_space<vmem>>, %arg9: memref<1x1x32xf32, #tpu.memory_space<vmem>>, %arg10: memref<1x1x32xf32, #tpu.memory_space<vmem>>, %arg11: memref<1x32x64xbf16, #tpu.memory_space<vmem>>, %arg12: memref<1x1x64xf32, #tpu.memory_space<vmem>>, %arg13: memref<1x64x32xbf16, #tpu.memory_space<vmem>>, %arg14: memref<1x1x32xf32, #tpu.memory_space<vmem>>, %arg15: memref<8x32xf32, #tpu.memory_space<vmem>>, %arg16: memref<1x1x4x8x8xf32, #tpu.memory_space<vmem>>, %arg17: memref<8x32xf32, #tpu.memory_space<vmem>>) attributes {dimension_semantics = [#tpu.dimension_semantics<parallel>, #tpu.dimension_semantics<arbitrary>], iteration_bounds = array<i64: 2, 2>, scalar_prefetch = 0 : i64, scratch_operands = 1 : i64, tpu.core_type = #tpu.core_type<tc>, window_params = [{transform_indices = @transform_0, window_bounds = array<i64: 8, 32>}, {transform_indices = @transform_1, window_bounds = array<i64: 1, 1, 32>}, {transform_indices = @transform_2, window_bounds = array<i64: 1, 1, 32>}, {transform_indices = @transform_3, window_bounds = array<i64: 1, 32, 96>}, {transform_indices = @transform_4, window_bounds = array<i64: 1, 1, 96>}, {transform_indices = @transform_5, window_bounds = array<i64: 1, 32, 32>}, {transform_indices = @transform_6, window_bounds = array<i64: 1, 1, 32>}, {transform_indices = @transform_7, window_bounds = array<i64: 1, 1, 32>}, {transform_indices = @transform_8, window_bounds = array<i64: 1, 1, 32>}, {transform_indices = @transform_9, window_bounds = array<i64: 1, 32, 64>}, {transform_indices = @transform_10, window_bounds = array<i64: 1, 1, 64>}, {transform_indices = @transform_11, window_bounds = array<i64: 1, 64, 32>}, {transform_indices = @transform_12, window_bounds = array<i64: 1, 1, 32>}, {transform_indices = @transform_13, window_bounds = array<i64: 8, 32>}, {transform_indices = @transform_14, window_bounds = array<i64: 1, 1, 4, 8, 8>}]} {
    %c0_i32 = arith.constant 0 : i32
    %0 = arith.cmpi eq, %arg1, %c0_i32 : i32
    %1 = arith.extui %0 : i1 to i32
    %c0_i32_0 = arith.constant 0 : i32
    %2 = arith.cmpi ne, %1, %c0_i32_0 : i32
    scf.if %2 {
      %c0_78 = arith.constant 0 : index
      %c0_79 = arith.constant 0 : index
      %201 = vector.load %arg2[%c0_78, %c0_79] : memref<8x32xf32, #tpu.memory_space<vmem>>, vector<8x32xf32>
      %c0_80 = arith.constant 0 : index
      %c0_81 = arith.constant 0 : index
      %202 = vector.load %arg17[%c0_80, %c0_81] : memref<8x32xf32, #tpu.memory_space<vmem>>, vector<8x32xf32>
      tpu.vector_store %arg17[%c0_80, %c0_81], %201 {strides = array<i32>} : memref<8x32xf32, #tpu.memory_space<vmem>>, vector<8x32xf32>,
    } else {
    }
    %c0 = arith.constant 0 : index
    %c0_1 = arith.constant 0 : index
    %3 = vector.load %arg17[%c0, %c0_1] : memref<8x32xf32, #tpu.memory_space<vmem>>, vector<8x32xf32>
    %c0_2 = arith.constant 0 : index
    %c0_3 = arith.constant 0 : index
    %c0_4 = arith.constant 0 : index
    %4 = vector.load %arg3[%c0_2, %c0_3, %c0_4] : memref<1x1x32xf32, #tpu.memory_space<vmem>>, vector<1x1x32xf32>
    %5 = vector.shape_cast %4 : vector<1x1x32xf32> to vector<1x32xf32>
    %c0_5 = arith.constant 0 : index
    %c0_6 = arith.constant 0 : index
    %c0_7 = arith.constant 0 : index
    %6 = vector.load %arg4[%c0_5, %c0_6, %c0_7] : memref<1x1x32xf32, #tpu.memory_space<vmem>>, vector<1x1x32xf32>
    %7 = vector.shape_cast %6 : vector<1x1x32xf32> to vector<1x32xf32>
    %cst = arith.constant dense<0.000000e+00> : vector<8xf32>
    %8 = vector.multi_reduction <add>, %3, %cst [1] : vector<8x32xf32> to vector<8xf32>
    %9 = vector.shape_cast %8 : vector<8xf32> to vector<8x1xf32>
    %cst_8 = arith.constant 3.200000e+01 : f32
    %10 = vector.broadcast %cst_8 : f32 to vector<8x1xf32>
    %11 = arith.divf %9, %10 : vector<8x1xf32>
    %12 = vector.broadcast %11 : vector<8x1xf32> to vector<8x32xf32>
    %13 = arith.subf %3, %12 : vector<8x32xf32>
    %14 = arith.mulf %13, %13 : vector<8x32xf32>
    %cst_9 = arith.constant dense<0.000000e+00> : vector<8xf32>
    %15 = vector.multi_reduction <add>, %14, %cst_9 [1] : vector<8x32xf32> to vector<8xf32>
    %16 = vector.shape_cast %15 : vector<8xf32> to vector<8x1xf32>
    %cst_10 = arith.constant 3.200000e+01 : f32
    %17 = vector.broadcast %cst_10 : f32 to vector<8x1xf32>
    %18 = arith.divf %16, %17 : vector<8x1xf32>
    %19 = vector.broadcast %11 : vector<8x1xf32> to vector<8x32xf32>
    %20 = arith.subf %3, %19 : vector<8x32xf32>
    %cst_11 = arith.constant 9.99999997E-7 : f32
    %21 = vector.broadcast %cst_11 : f32 to vector<8x1xf32>
    %22 = arith.addf %18, %21 : vector<8x1xf32>
    %23 = math.rsqrt %22 : vector<8x1xf32>
    %24 = vector.broadcast %23 : vector<8x1xf32> to vector<8x32xf32>
    %25 = arith.mulf %20, %24 : vector<8x32xf32>
    %26 = vector.broadcast %5 : vector<1x32xf32> to vector<8x32xf32>
    %27 = arith.mulf %25, %26 : vector<8x32xf32>
    %28 = vector.broadcast %7 : vector<1x32xf32> to vector<8x32xf32>
    %29 = arith.addf %27, %28 : vector<8x32xf32>
    %30 = arith.truncf %29 : vector<8x32xf32> to vector<8x32xbf16>
    %c0_12 = arith.constant 0 : index
    %c0_13 = arith.constant 0 : index
    %c0_14 = arith.constant 0 : index
    %31 = vector.load %arg5[%c0_12, %c0_13, %c0_14] : memref<1x32x96xbf16, #tpu.memory_space<vmem>>, vector<1x32x96xbf16>
    %32 = vector.shape_cast %31 : vector<1x32x96xbf16> to vector<32x96xbf16>
    %cst_15 = arith.constant dense<0.000000e+00> : vector<8x96xf32>
    %33 = tpu.matmul %30, %32, %cst_15 {dimension_numbers = #tpu.dot_dimension_numbers<[1], [0], [0], [1], [0, 0, 1, 1], [], []>} : vector<8x32xbf16>, vector<32x96xbf16>, vector<8x96xf32> -> vector<8x96xf32>
    %c0_16 = arith.constant 0 : index
    %c0_17 = arith.constant 0 : index
    %c0_18 = arith.constant 0 : index
    %34 = vector.load %arg6[%c0_16, %c0_17, %c0_18] : memref<1x1x96xf32, #tpu.memory_space<vmem>>, vector<1x1x96xf32>
    %35 = vector.shape_cast %34 : vector<1x1x96xf32> to vector<1x96xf32>
    %36 = vector.broadcast %35 : vector<1x96xf32> to vector<8x96xf32>
    %37 = arith.addf %33, %36 : vector<8x96xf32>
    %38 = vector.extract_strided_slice %37 {offsets = [0, 0], sizes = [8, 32], strides = [1, 1]} : vector<8x96xf32> to vector<8x32xf32>
    %39 = vector.extract_strided_slice %37 {offsets = [0, 32], sizes = [8, 32], strides = [1, 1]} : vector<8x96xf32> to vector<8x32xf32>
    %40 = vector.extract_strided_slice %37 {offsets = [0, 64], sizes = [8, 32], strides = [1, 1]} : vector<8x96xf32> to vector<8x32xf32>
    %41 = vector.shape_cast %38 : vector<8x32xf32> to vector<1x8x32xf32>
    %42 = vector.extract_strided_slice %41 {offsets = [0, 0, 0], sizes = [1, 8, 8], strides = [1, 1, 1]} : vector<1x8x32xf32> to vector<1x8x8xf32>
    %43 = vector.extract_strided_slice %41 {offsets = [0, 0, 8], sizes = [1, 8, 8], strides = [1, 1, 1]} : vector<1x8x32xf32> to vector<1x8x8xf32>
    %44 = vector.extract_strided_slice %41 {offsets = [0, 0, 16], sizes = [1, 8, 8], strides = [1, 1, 1]} : vector<1x8x32xf32> to vector<1x8x8xf32>
    %45 = vector.extract_strided_slice %41 {offsets = [0, 0, 24], sizes = [1, 8, 8], strides = [1, 1, 1]} : vector<1x8x32xf32> to vector<1x8x8xf32>
    %46 = vector.shape_cast %42 : vector<1x8x8xf32> to vector<1x1x8x8xf32>
    %47 = vector.shape_cast %43 : vector<1x8x8xf32> to vector<1x1x8x8xf32>
    %48 = vector.shape_cast %44 : vector<1x8x8xf32> to vector<1x1x8x8xf32>
    %49 = vector.shape_cast %45 : vector<1x8x8xf32> to vector<1x1x8x8xf32>
    %50 = tpu.concatenate %46, %47, %48, %49 in 1 : vector<1x1x8x8xf32>, vector<1x1x8x8xf32>, vector<1x1x8x8xf32>, vector<1x1x8x8xf32> -> vector<1x4x8x8xf32>
    %51 = vector.shape_cast %50 : vector<1x4x8x8xf32> to vector<4x8x8xf32>
    %52 = arith.truncf %51 : vector<4x8x8xf32> to vector<4x8x8xbf16>
    %53 = vector.shape_cast %39 : vector<8x32xf32> to vector<1x8x32xf32>
    %54 = vector.extract_strided_slice %53 {offsets = [0, 0, 0], sizes = [1, 8, 8], strides = [1, 1, 1]} : vector<1x8x32xf32> to vector<1x8x8xf32>
    %55 = vector.extract_strided_slice %53 {offsets = [0, 0, 8], sizes = [1, 8, 8], strides = [1, 1, 1]} : vector<1x8x32xf32> to vector<1x8x8xf32>
    %56 = vector.extract_strided_slice %53 {offsets = [0, 0, 16], sizes = [1, 8, 8], strides = [1, 1, 1]} : vector<1x8x32xf32> to vector<1x8x8xf32>
    %57 = vector.extract_strided_slice %53 {offsets = [0, 0, 24], sizes = [1, 8, 8], strides = [1, 1, 1]} : vector<1x8x32xf32> to vector<1x8x8xf32>
    %58 = vector.shape_cast %54 : vector<1x8x8xf32> to vector<1x1x8x8xf32>
    %59 = vector.shape_cast %55 : vector<1x8x8xf32> to vector<1x1x8x8xf32>
    %60 = vector.shape_cast %56 : vector<1x8x8xf32> to vector<1x1x8x8xf32>
    %61 = vector.shape_cast %57 : vector<1x8x8xf32> to vector<1x1x8x8xf32>
    %62 = tpu.concatenate %58, %59, %60, %61 in 1 : vector<1x1x8x8xf32>, vector<1x1x8x8xf32>, vector<1x1x8x8xf32>, vector<1x1x8x8xf32> -> vector<1x4x8x8xf32>
    %63 = vector.shape_cast %62 : vector<1x4x8x8xf32> to vector<4x8x8xf32>
    %64 = arith.truncf %63 : vector<4x8x8xf32> to vector<4x8x8xbf16>
    %65 = vector.shape_cast %40 : vector<8x32xf32> to vector<1x8x32xf32>
    %66 = vector.extract_strided_slice %65 {offsets = [0, 0, 0], sizes = [1, 8, 8], strides = [1, 1, 1]} : vector<1x8x32xf32> to vector<1x8x8xf32>
    %67 = vector.extract_strided_slice %65 {offsets = [0, 0, 8], sizes = [1, 8, 8], strides = [1, 1, 1]} : vector<1x8x32xf32> to vector<1x8x8xf32>
    %68 = vector.extract_strided_slice %65 {offsets = [0, 0, 16], sizes = [1, 8, 8], strides = [1, 1, 1]} : vector<1x8x32xf32> to vector<1x8x8xf32>
    %69 = vector.extract_strided_slice %65 {offsets = [0, 0, 24], sizes = [1, 8, 8], strides = [1, 1, 1]} : vector<1x8x32xf32> to vector<1x8x8xf32>
    %70 = vector.shape_cast %66 : vector<1x8x8xf32> to vector<1x1x8x8xf32>
    %71 = vector.shape_cast %67 : vector<1x8x8xf32> to vector<1x1x8x8xf32>
    %72 = vector.shape_cast %68 : vector<1x8x8xf32> to vector<1x1x8x8xf32>
    %73 = vector.shape_cast %69 : vector<1x8x8xf32> to vector<1x1x8x8xf32>
    %74 = tpu.concatenate %70, %71, %72, %73 in 1 : vector<1x1x8x8xf32>, vector<1x1x8x8xf32>, vector<1x1x8x8xf32>, vector<1x1x8x8xf32> -> vector<1x4x8x8xf32>
    %75 = vector.shape_cast %74 : vector<1x4x8x8xf32> to vector<4x8x8xf32>
    %76 = arith.truncf %75 : vector<4x8x8xf32> to vector<4x8x8xbf16>
    "tpu.trace_start"() <{level = 10 : i32, message = "gqd,gkd->gqk"}> : () -> ()
    %cst_19 = arith.constant dense<0.000000e+00> : vector<4x8x8xf32>
    %77 = tpu.matmul %52, %64, %cst_19 {dimension_numbers = #tpu.dot_dimension_numbers<[2], [2], [1], [1], [0, 0, 0, 1, 1, 1], [0], [0]>} : vector<4x8x8xbf16>, vector<4x8x8xbf16>, vector<4x8x8xf32> -> vector<4x8x8xf32>
    "tpu.trace_stop"() : () -> ()
    %cst_20 = arith.constant dense<0xFF800000> : vector<4x8xf32>
    %78 = vector.multi_reduction <maximumf>, %77, %cst_20 [2] : vector<4x8x8xf32> to vector<4x8xf32>
    %79 = vector.shape_cast %78 : vector<4x8xf32> to vector<4x8x1xf32>
    %80 = vector.broadcast %79 : vector<4x8x1xf32> to vector<4x8x8xf32>
    %81 = arith.subf %77, %80 : vector<4x8x8xf32>
    %82 = math.exp %81 : vector<4x8x8xf32>
    %cst_21 = arith.constant dense<0.000000e+00> : vector<4x8xf32>
    %83 = vector.multi_reduction <add>, %82, %cst_21 [2] : vector<4x8x8xf32> to vector<4x8xf32>
    %84 = vector.shape_cast %83 : vector<4x8xf32> to vector<4x8x1xf32>
    %85 = tpu.reciprocal %84 {approx = true} : vector<4x8x1xf32> -> vector<4x8x1xf32>
    %86 = vector.broadcast %85 : vector<4x8x1xf32> to vector<4x8x8xf32>
    %87 = arith.mulf %82, %86 : vector<4x8x8xf32>
    %88 = vector.shape_cast %87 : vector<4x8x8xf32> to vector<1x4x8x8xf32>
    %c0_22 = arith.constant 0 : index
    %c0_23 = arith.constant 0 : index
    %c0_24 = arith.constant 0 : index
    %c0_25 = arith.constant 0 : index
    %c0_26 = arith.constant 0 : index
    %89 = vector.load %arg16[%c0_22, %c0_23, %c0_24, %c0_25, %c0_26] : memref<1x1x4x8x8xf32, #tpu.memory_space<vmem>>, vector<1x1x4x8x8xf32>
    %90 = vector.shape_cast %89 : vector<1x1x4x8x8xf32> to vector<1x4x8x8xf32>
    %91 = vector.shape_cast %88 : vector<1x4x8x8xf32> to vector<1x1x4x8x8xf32>
    tpu.vector_store %arg16[%c0_22, %c0_23, %c0_24, %c0_25, %c0_26], %91 {strides = array<i32>} : memref<1x1x4x8x8xf32, #tpu.memory_space<vmem>>, vector<1x1x4x8x8xf32>,
    %92 = arith.truncf %87 : vector<4x8x8xf32> to vector<4x8x8xbf16>
    "tpu.trace_start"() <{level = 10 : i32, message = "gqk,gkd->gqd"}> : () -> ()
    %cst_27 = arith.constant dense<0.000000e+00> : vector<4x8x8xf32>
    %93 = tpu.matmul %92, %76, %cst_27 {dimension_numbers = #tpu.dot_dimension_numbers<[2], [1], [1], [2], [0, 0, 0, 1, 1, 2], [0], [0]>} : vector<4x8x8xbf16>, vector<4x8x8xbf16>, vector<4x8x8xf32> -> vector<4x8x8xf32>
    "tpu.trace_stop"() : () -> ()
    %94 = vector.shape_cast %93 : vector<4x8x8xf32> to vector<1x4x8x8xf32>
    %95 = vector.extract_strided_slice %94 {offsets = [0, 0, 0, 0], sizes = [1, 1, 8, 8], strides = [1, 1, 1, 1]} : vector<1x4x8x8xf32> to vector<1x1x8x8xf32>
    %96 = vector.shape_cast %95 : vector<1x1x8x8xf32> to vector<1x8x8xf32>
    %97 = vector.extract_strided_slice %94 {offsets = [0, 1, 0, 0], sizes = [1, 1, 8, 8], strides = [1, 1, 1, 1]} : vector<1x4x8x8xf32> to vector<1x1x8x8xf32>
    %98 = vector.shape_cast %97 : vector<1x1x8x8xf32> to vector<1x8x8xf32>
    %99 = vector.extract_strided_slice %94 {offsets = [0, 2, 0, 0], sizes = [1, 1, 8, 8], strides = [1, 1, 1, 1]} : vector<1x4x8x8xf32> to vector<1x1x8x8xf32>
    %100 = vector.shape_cast %99 : vector<1x1x8x8xf32> to vector<1x8x8xf32>
    %101 = vector.extract_strided_slice %94 {offsets = [0, 3, 0, 0], sizes = [1, 1, 8, 8], strides = [1, 1, 1, 1]} : vector<1x4x8x8xf32> to vector<1x1x8x8xf32>
    %102 = vector.shape_cast %101 : vector<1x1x8x8xf32> to vector<1x8x8xf32>
    %103 = tpu.concatenate %96, %98, %100, %102 in 2 : vector<1x8x8xf32>, vector<1x8x8xf32>, vector<1x8x8xf32>, vector<1x8x8xf32> -> vector<1x8x32xf32>
    %104 = vector.shape_cast %103 : vector<1x8x32xf32> to vector<8x32xf32>
    %105 = arith.truncf %104 : vector<8x32xf32> to vector<8x32xbf16>
    %c0_28 = arith.constant 0 : index
    %c0_29 = arith.constant 0 : index
    %c0_30 = arith.constant 0 : index
    %106 = vector.load %arg7[%c0_28, %c0_29, %c0_30] : memref<1x32x32xbf16, #tpu.memory_space<vmem>>, vector<1x32x32xbf16>
    %107 = vector.shape_cast %106 : vector<1x32x32xbf16> to vector<32x32xbf16>
    %cst_31 = arith.constant dense<0.000000e+00> : vector<8x32xf32>
    %108 = tpu.matmul %105, %107, %cst_31 {dimension_numbers = #tpu.dot_dimension_numbers<[1], [0], [0], [1], [0, 0, 1, 1], [], []>} : vector<8x32xbf16>, vector<32x32xbf16>, vector<8x32xf32> -> vector<8x32xf32>
    %c0_32 = arith.constant 0 : index
    %c0_33 = arith.constant 0 : index
    %c0_34 = arith.constant 0 : index
    %109 = vector.load %arg8[%c0_32, %c0_33, %c0_34] : memref<1x1x32xf32, #tpu.memory_space<vmem>>, vector<1x1x32xf32>
    %110 = vector.shape_cast %109 : vector<1x1x32xf32> to vector<1x32xf32>
    %111 = vector.broadcast %110 : vector<1x32xf32> to vector<8x32xf32>
    %112 = arith.addf %108, %111 : vector<8x32xf32>
    %113 = arith.addf %3, %112 : vector<8x32xf32>
    %c0_35 = arith.constant 0 : index
    %c0_36 = arith.constant 0 : index
    %c0_37 = arith.constant 0 : index
    %114 = vector.load %arg9[%c0_35, %c0_36, %c0_37] : memref<1x1x32xf32, #tpu.memory_space<vmem>>, vector<1x1x32xf32>
    %115 = vector.shape_cast %114 : vector<1x1x32xf32> to vector<1x32xf32>
    %c0_38 = arith.constant 0 : index
    %c0_39 = arith.constant 0 : index
    %c0_40 = arith.constant 0 : index
    %116 = vector.load %arg10[%c0_38, %c0_39, %c0_40] : memref<1x1x32xf32, #tpu.memory_space<vmem>>, vector<1x1x32xf32>
    %117 = vector.shape_cast %116 : vector<1x1x32xf32> to vector<1x32xf32>
    %cst_41 = arith.constant dense<0.000000e+00> : vector<8xf32>
    %118 = vector.multi_reduction <add>, %113, %cst_41 [1] : vector<8x32xf32> to vector<8xf32>
    %119 = vector.shape_cast %118 : vector<8xf32> to vector<8x1xf32>
    %cst_42 = arith.constant 3.200000e+01 : f32
    %120 = vector.broadcast %cst_42 : f32 to vector<8x1xf32>
    %121 = arith.divf %119, %120 : vector<8x1xf32>
    %122 = vector.broadcast %121 : vector<8x1xf32> to vector<8x32xf32>
    %123 = arith.subf %113, %122 : vector<8x32xf32>
    %124 = arith.mulf %123, %123 : vector<8x32xf32>
    %cst_43 = arith.constant dense<0.000000e+00> : vector<8xf32>
    %125 = vector.multi_reduction <add>, %124, %cst_43 [1] : vector<8x32xf32> to vector<8xf32>
    %126 = vector.shape_cast %125 : vector<8xf32> to vector<8x1xf32>
    %cst_44 = arith.constant 3.200000e+01 : f32
    %127 = vector.broadcast %cst_44 : f32 to vector<8x1xf32>
    %128 = arith.divf %126, %127 : vector<8x1xf32>
    %129 = vector.broadcast %121 : vector<8x1xf32> to vector<8x32xf32>
    %130 = arith.subf %113, %129 : vector<8x32xf32>
    %cst_45 = arith.constant 9.99999997E-7 : f32
    %131 = vector.broadcast %cst_45 : f32 to vector<8x1xf32>
    %132 = arith.addf %128, %131 : vector<8x1xf32>
    %133 = math.rsqrt %132 : vector<8x1xf32>
    %134 = vector.broadcast %133 : vector<8x1xf32> to vector<8x32xf32>
    %135 = arith.mulf %130, %134 : vector<8x32xf32>
    %136 = vector.broadcast %115 : vector<1x32xf32> to vector<8x32xf32>
    %137 = arith.mulf %135, %136 : vector<8x32xf32>
    %138 = vector.broadcast %117 : vector<1x32xf32> to vector<8x32xf32>
    %139 = arith.addf %137, %138 : vector<8x32xf32>
    %140 = arith.truncf %139 : vector<8x32xf32> to vector<8x32xbf16>
    %c0_46 = arith.constant 0 : index
    %c0_47 = arith.constant 0 : index
    %c0_48 = arith.constant 0 : index
    %141 = vector.load %arg11[%c0_46, %c0_47, %c0_48] : memref<1x32x64xbf16, #tpu.memory_space<vmem>>, vector<1x32x64xbf16>
    %142 = vector.shape_cast %141 : vector<1x32x64xbf16> to vector<32x64xbf16>
    %cst_49 = arith.constant dense<0.000000e+00> : vector<8x64xf32>
    %143 = tpu.matmul %140, %142, %cst_49 {dimension_numbers = #tpu.dot_dimension_numbers<[1], [0], [0], [1], [0, 0, 1, 1], [], []>} : vector<8x32xbf16>, vector<32x64xbf16>, vector<8x64xf32> -> vector<8x64xf32>
    %c0_50 = arith.constant 0 : index
    %c0_51 = arith.constant 0 : index
    %c0_52 = arith.constant 0 : index
    %144 = vector.load %arg12[%c0_50, %c0_51, %c0_52] : memref<1x1x64xf32, #tpu.memory_space<vmem>>, vector<1x1x64xf32>
    %145 = vector.shape_cast %144 : vector<1x1x64xf32> to vector<1x64xf32>
    %146 = vector.broadcast %145 : vector<1x64xf32> to vector<8x64xf32>
    %147 = arith.addf %143, %146 : vector<8x64xf32>
    %cst_53 = arith.constant 5.000000e-01 : f32
    %148 = vector.broadcast %cst_53 : f32 to vector<8x64xf32>
    %149 = arith.mulf %148, %147 : vector<8x64xf32>
    %cst_54 = arith.constant 0.707106769 : f32
    %150 = vector.broadcast %cst_54 : f32 to vector<8x64xf32>
    %151 = arith.mulf %147, %150 : vector<8x64xf32>
    %152 = math.absf %151 : vector<8x64xf32>
    %cst_55 = arith.constant 0.327591091 : f32
    %153 = vector.broadcast %cst_55 : f32 to vector<8x64xf32>
    %154 = arith.mulf %153, %152 : vector<8x64xf32>
    %cst_56 = arith.constant 1.000000e+00 : f32
    %155 = vector.broadcast %cst_56 : f32 to vector<8x64xf32>
    %156 = arith.addf %155, %154 : vector<8x64xf32>
    %cst_57 = arith.constant 1.000000e+00 : f32
    %157 = vector.broadcast %cst_57 : f32 to vector<8x64xf32>
    %158 = arith.divf %157, %156 : vector<8x64xf32>
    %cst_58 = arith.constant 1.06140542 : f32
    %159 = vector.broadcast %cst_58 : f32 to vector<8x64xf32>
    %160 = arith.mulf %158, %159 : vector<8x64xf32>
    %cst_59 = arith.constant -1.45315206 : f32
    %161 = vector.broadcast %cst_59 : f32 to vector<8x64xf32>
    %162 = arith.addf %161, %160 : vector<8x64xf32>
    %163 = arith.mulf %158, %162 : vector<8x64xf32>
    %cst_60 = arith.constant 1.42141378 : f32
    %164 = vector.broadcast %cst_60 : f32 to vector<8x64xf32>
    %165 = arith.addf %164, %163 : vector<8x64xf32>
    %166 = arith.mulf %158, %165 : vector<8x64xf32>
    %cst_61 = arith.constant -0.284496725 : f32
    %167 = vector.broadcast %cst_61 : f32 to vector<8x64xf32>
    %168 = arith.addf %167, %166 : vector<8x64xf32>
    %169 = arith.mulf %158, %168 : vector<8x64xf32>
    %cst_62 = arith.constant 0.254829586 : f32
    %170 = vector.broadcast %cst_62 : f32 to vector<8x64xf32>
    %171 = arith.addf %170, %169 : vector<8x64xf32>
    %172 = arith.mulf %158, %171 : vector<8x64xf32>
    %cst_63 = arith.constant 0.000000e+00 : f32
    %173 = vector.broadcast %cst_63 : f32 to vector<8x64xf32>
    %174 = arith.subf %173, %152 : vector<8x64xf32>
    %175 = arith.mulf %174, %152 : vector<8x64xf32>
    %176 = math.exp %175 : vector<8x64xf32>
    %177 = arith.mulf %172, %176 : vector<8x64xf32>
    %cst_64 = arith.constant 1.000000e+00 : f32
    %178 = vector.broadcast %cst_64 : f32 to vector<8x64xf32>
    %179 = arith.subf %178, %177 : vector<8x64xf32>
    %cst_65 = arith.constant 0.000000e+00 : f32
    %180 = vector.broadcast %cst_65 : f32 to vector<8x64xf32>
    %181 = arith.cmpf oge, %151, %180 : vector<8x64xf32>
    %cst_66 = arith.constant 0.000000e+00 : f32
    %182 = vector.broadcast %cst_66 : f32 to vector<8x64xf32>
    %183 = arith.subf %182, %179 : vector<8x64xf32>
    %184 = arith.select %181, %179, %183 : vector<8x64xi1>, vector<8x64xf32>
    %cst_67 = arith.constant 1.000000e+00 : f32
    %185 = vector.broadcast %cst_67 : f32 to vector<8x64xf32>
    %186 = arith.addf %185, %184 : vector<8x64xf32>
    %187 = arith.mulf %149, %186 : vector<8x64xf32>
    %188 = arith.truncf %187 : vector<8x64xf32> to vector<8x64xbf16>
    %c0_68 = arith.constant 0 : index
    %c0_69 = arith.constant 0 : index
    %c0_70 = arith.constant 0 : index
    %189 = vector.load %arg13[%c0_68, %c0_69, %c0_70] : memref<1x64x32xbf16, #tpu.memory_space<vmem>>, vector<1x64x32xbf16>
    %190 = vector.shape_cast %189 : vector<1x64x32xbf16> to vector<64x32xbf16>
    %cst_71 = arith.constant dense<0.000000e+00> : vector<8x32xf32>
    %191 = tpu.matmul %188, %190, %cst_71 {dimension_numbers = #tpu.dot_dimension_numbers<[1], [0], [0], [1], [0, 0, 1, 1], [], []>} : vector<8x64xbf16>, vector<64x32xbf16>, vector<8x32xf32> -> vector<8x32xf32>
    %c0_72 = arith.constant 0 : index
    %c0_73 = arith.constant 0 : index
    %c0_74 = arith.constant 0 : index
    %192 = vector.load %arg14[%c0_72, %c0_73, %c0_74] : memref<1x1x32xf32, #tpu.memory_space<vmem>>, vector<1x1x32xf32>
    %193 = vector.shape_cast %192 : vector<1x1x32xf32> to vector<1x32xf32>
    %194 = vector.broadcast %193 : vector<1x32xf32> to vector<8x32xf32>
    %195 = arith.addf %191, %194 : vector<8x32xf32>
    %196 = arith.addf %113, %195 : vector<8x32xf32>
    %c0_75 = arith.constant 0 : index
    %c0_76 = arith.constant 0 : index
    %197 = vector.load %arg17[%c0_75, %c0_76] : memref<8x32xf32, #tpu.memory_space<vmem>>, vector<8x32xf32>
    tpu.vector_store %arg17[%c0_75, %c0_76], %196 {strides = array<i32>} : memref<8x32xf32, #tpu.memory_space<vmem>>, vector<8x32xf32>,
    %c1_i32 = arith.constant 1 : i32
    %198 = arith.cmpi eq, %arg1, %c1_i32 : i32
    %199 = arith.extui %198 : i1 to i32
    %c0_i32_77 = arith.constant 0 : i32
    %200 = arith.cmpi ne, %199, %c0_i32_77 : i32
    scf.if %200 {
      %c0_78 = arith.constant 0 : index
      %c0_79 = arith.constant 0 : index
      %201 = vector.load %arg15[%c0_78, %c0_79] : memref<8x32xf32, #tpu.memory_space<vmem>>, vector<8x32xf32>
      tpu.vector_store %arg15[%c0_78, %c0_79], %196 {strides = array<i32>} : memref<8x32xf32, #tpu.memory_space<vmem>>, vector<8x32xf32>,
    } else {
    }
    return
  }
  func.func @transform_0(%arg0: i32, %arg1: i32) -> (i32, i32) {
    %c0_i32 = arith.constant 0 : i32
    %c0_i32_0 = arith.constant 0 : i32
    return %arg0, %c0_i32 : i32, i32
  }
  func.func @transform_1(%arg0: i32, %arg1: i32) -> (i32, i32, i32) {
    %c0_i32 = arith.constant 0 : i32
    %c0_i32_0 = arith.constant 0 : i32
    %c0_i32_1 = arith.constant 0 : i32
    return %arg1, %c0_i32, %c0_i32_0 : i32, i32, i32
  }
  func.func @transform_2(%arg0: i32, %arg1: i32) -> (i32, i32, i32) {
    %c0_i32 = arith.constant 0 : i32
    %c0_i32_0 = arith.constant 0 : i32
    %c0_i32_1 = arith.constant 0 : i32
    return %arg1, %c0_i32, %c0_i32_0 : i32, i32, i32
  }
  func.func @transform_3(%arg0: i32, %arg1: i32) -> (i32, i32, i32) {
    %c0_i32 = arith.constant 0 : i32
    %c0_i32_0 = arith.constant 0 : i32
    %c0_i32_1 = arith.constant 0 : i32
    return %arg1, %c0_i32, %c0_i32_0 : i32, i32, i32
  }
  func.func @transform_4(%arg0: i32, %arg1: i32) -> (i32, i32, i32) {
    %c0_i32 = arith.constant 0 : i32
    %c0_i32_0 = arith.constant 0 : i32
    %c0_i32_1 = arith.constant 0 : i32
    return %arg1, %c0_i32, %c0_i32_0 : i32, i32, i32
  }
  func.func @transform_5(%arg0: i32, %arg1: i32) -> (i32, i32, i32) {
    %c0_i32 = arith.constant 0 : i32
    %c0_i32_0 = arith.constant 0 : i32
    %c0_i32_1 = arith.constant 0 : i32
    return %arg1, %c0_i32, %c0_i32_0 : i32, i32, i32
  }
  func.func @transform_6(%arg0: i32, %arg1: i32) -> (i32, i32, i32) {
    %c0_i32 = arith.constant 0 : i32
    %c0_i32_0 = arith.constant 0 : i32
    %c0_i32_1 = arith.constant 0 : i32
    return %arg1, %c0_i32, %c0_i32_0 : i32, i32, i32
  }
  func.func @transform_7(%arg0: i32, %arg1: i32) -> (i32, i32, i32) {
    %c0_i32 = arith.constant 0 : i32
    %c0_i32_0 = arith.constant 0 : i32
    %c0_i32_1 = arith.constant 0 : i32
    return %arg1, %c0_i32, %c0_i32_0 : i32, i32, i32
  }
  func.func @transform_8(%arg0: i32, %arg1: i32) -> (i32, i32, i32) {
    %c0_i32 = arith.constant 0 : i32
    %c0_i32_0 = arith.constant 0 : i32
    %c0_i32_1 = arith.constant 0 : i32
    return %arg1, %c0_i32, %c0_i32_0 : i32, i32, i32
  }
  func.func @transform_9(%arg0: i32, %arg1: i32) -> (i32, i32, i32) {
    %c0_i32 = arith.constant 0 : i32
    %c0_i32_0 = arith.constant 0 : i32
    %c0_i32_1 = arith.constant 0 : i32
    return %arg1, %c0_i32, %c0_i32_0 : i32, i32, i32
  }
  func.func @transform_10(%arg0: i32, %arg1: i32) -> (i32, i32, i32) {
    %c0_i32 = arith.constant 0 : i32
    %c0_i32_0 = arith.constant 0 : i32
    %c0_i32_1 = arith.constant 0 : i32
    return %arg1, %c0_i32, %c0_i32_0 : i32, i32, i32
  }
  func.func @transform_11(%arg0: i32, %arg1: i32) -> (i32, i32, i32) {
    %c0_i32 = arith.constant 0 : i32
    %c0_i32_0 = arith.constant 0 : i32
    %c0_i32_1 = arith.constant 0 : i32
    return %arg1, %c0_i32, %c0_i32_0 : i32, i32, i32
  }
  func.func @transform_12(%arg0: i32, %arg1: i32) -> (i32, i32, i32) {
    %c0_i32 = arith.constant 0 : i32
    %c0_i32_0 = arith.constant 0 : i32
    %c0_i32_1 = arith.constant 0 : i32
    return %arg1, %c0_i32, %c0_i32_0 : i32, i32, i32
  }
  func.func @transform_13(%arg0: i32, %arg1: i32) -> (i32, i32) {
    %c0_i32 = arith.constant 0 : i32
    %c0_i32_0 = arith.constant 0 : i32
    return %arg0, %c0_i32 : i32, i32
  }
  func.func @transform_14(%arg0: i32, %arg1: i32) -> (i32, i32, i32, i32, i32) {
    %c0_i32 = arith.constant 0 : i32
    %c0_i32_0 = arith.constant 0 : i32
    %c0_i32_1 = arith.constant 0 : i32
    %c0_i32_2 = arith.constant 0 : i32
    return %arg1, %arg0, %c0_i32, %c0_i32_0, %c0_i32_1 : i32, i32, i32, i32, i32
  }
}

</mosaic_0001>

<llo_original>
// kernel: tpu_custom_call.1
$region0: #{tpu_custom_call.1}
  #allocation0 [shape = 'u32[]', space=smem, size = 0x4, offset = 0x4, fixed_abs, tag = 'smem constant byte address 0x4 - core index']
  #allocation1 [shape = 'u32[144,128]{1,0:T(1,128)}', space=vmem, size = 0x12000, scoped, tag = 'internal scratch']
  #allocation2 [shape = 'f32[8,32]{1,0:T(8,128)}', space=vmem, size = 0x1000, scoped, tag = 'scratch operand']
  %s0 = inlined_call_operand.hbm [shape: f32[16,32], index: 0, kind: input, shape index: {}]
  %s1 = inlined_call_operand.hbm [shape: f32[2,1,32], index: 1, kind: input, shape index: {}]
  %s2 = inlined_call_operand.vmem [shape: f32[2,1,32], index: 2, kind: input, shape index: {}]
  %s3 = inlined_call_operand.vmem [shape: bf16[2,32,96], index: 3, kind: input, shape index: {}]
  %s4 = inlined_call_operand.vmem [shape: f32[2,1,96], index: 4, kind: input, shape index: {}]
  %s5 = inlined_call_operand.vmem [shape: bf16[2,32,32], index: 5, kind: input, shape index: {}]
  %s6 = inlined_call_operand.vmem [shape: f32[2,1,32], index: 6, kind: input, shape index: {}]
  %s7 = inlined_call_operand.vmem [shape: f32[2,1,32], index: 7, kind: input, shape index: {}]
  %s8 = inlined_call_operand.vmem [shape: f32[2,1,32], index: 8, kind: input, shape index: {}]
  %s9 = inlined_call_operand.vmem [shape: bf16[2,32,64], index: 9, kind: input, shape index: {}]
  %s10 = inlined_call_operand.vmem [shape: f32[2,1,64], index: 10, kind: input, shape index: {}]
  %s11 = inlined_call_operand.vmem [shape: bf16[2,64,32], index: 11, kind: input, shape index: {}]
  %s12 = inlined_call_operand.vmem [shape: f32[2,1,32], index: 12, kind: input, shape index: {}]
  %s13 = inlined_call_operand.hbm [shape: f32[16,32], index: 13, kind: output, shape index: {0}]
  %s14 = inlined_call_operand.hbm [shape: f32[2,2,4,8,8], index: 14, kind: output, shape index: {1}]
  %15 = xla_tuple %s13, %s14
  %s16 = sld [smem:[#allocation0]]
  $region109: #{tpu_custom_call.1} parent=0
    _
  %s18 = ssub.s32 1, %s16
  %s19 = scalar_select 0, %s18, %s16
  $region1: #{tpu_custom_call.1} parent=0
    #allocation3 [shape = 'u8[8192]{0}', space=vmem, size = 0x2000, scoped, tag = 'input window, operand 0']
    #allocation4 [shape = 's32[2]{0}', space=sflag, size = 0x8, scoped, tag = 'scoped memory for tpu_custom_call.1']
    #allocation5 [shape = 's32[2]{0}', space=sflag, size = 0x8, scoped, tag = 'scoped memory for tpu_custom_call.1']
    #allocation6 [shape = 'u8[1024]{0}', space=vmem, size = 0x400, scoped, tag = 'input window, operand 1']
    #allocation7 [shape = 's32[2]{0}', space=sflag, size = 0x8, scoped, tag = 'scoped memory for tpu_custom_call.1']
    #allocation8 [shape = 'u8[8192]{0}', space=vmem, size = 0x2000, scoped, tag = 'output window, operand 0']
    #allocation9 [shape = 'u8[32768]{0}', space=vmem, size = 0x8000, scoped, tag = 'output window, operand 1']
    #allocation10 [shape = 's32[2]{0}', space=sflag, size = 0x8, scoped, tag = 'scoped memory for tpu_custom_call.1']
    %20 = vsyncpa [#allocation4], 0
    %s21 = scalar_lea.sflag [#allocation4], 1
    %22 = vsyncpa %s21, 0
    %23 = vsyncpa [#allocation7], 0
    %s24 = scalar_lea.sflag [#allocation7], 1
    %25 = vsyncpa %s24, 0
    %26 = vsyncpa [#allocation5], 0
    %s27 = scalar_lea.sflag [#allocation5], 1
    %28 = vsyncpa %s27, 0
    %29 = vsyncpa [#allocation10], 0
    %s30 = scalar_lea.sflag [#allocation10], 1
    %31 = vsyncpa %s30, 0
    loop: start=0, step=1, limit=6
    $region2: #{tpu_custom_call.1} parent=1 // loop_pre_header
      _
    $region3: #{tpu_custom_call.1} parent=1 // loop_header
      %s33 = sphi 0, %s37
      %p34 = scmp.ge.s32.totalorder %s33, 6
      %s40 = sphi 0, %s52
      %s41 = sphi 0, %s48
      %s42 = sphi 0, %s40
      %s43 = sphi 0, %s41
      %s44 = sphi 0, %s42
      %s45 = sphi 0, %s43
      %s55 = sphi 0, %s57
      %s58 = sphi 0, %s55
      %s59 = sphi 0, %s58
      %s75 = sphi 0, %s59
      %s81 = sphi 0, %s83
      %s84 = sphi 0, %s81
      %s85 = sphi 0, %s84
      %s101 = sphi 0, %s85
      %s107 = sphi 0, %s109
      %s110 = sphi 0, %s107
      %s111 = sphi 0, %s110
      %s127 = sphi 0, %s111
      %s133 = sphi 0, %s135
      %s136 = sphi 0, %s133
      %s137 = sphi 0, %s136
      %s153 = sphi 0, %s137
      %s159 = sphi 0, %s161
      %s162 = sphi 0, %s159
      %s163 = sphi 0, %s162
      %s179 = sphi 0, %s163
      %s185 = sphi 0, %s187
      %s188 = sphi 0, %s185
      %s189 = sphi 0, %s188
      %s205 = sphi 0, %s189
      %s211 = sphi 0, %s213
      %s214 = sphi 0, %s211
      %s215 = sphi 0, %s214
      %s231 = sphi 0, %s215
      %s237 = sphi 0, %s239
      %s240 = sphi 0, %s237
      %s241 = sphi 0, %s240
      %s257 = sphi 0, %s241
      %s263 = sphi 0, %s265
      %s266 = sphi 0, %s263
      %s267 = sphi 0, %s266
      %s283 = sphi 0, %s267
      %s289 = sphi 0, %s291
      %s292 = sphi 0, %s289
      %s293 = sphi 0, %s292
      %s309 = sphi 0, %s293
      %s315 = sphi 0, %s317
      %s318 = sphi 0, %s315
      %s319 = sphi 0, %s318
      %s335 = sphi 0, %s319
      %s341 = sphi 0, %s343
      %s344 = sphi 0, %s341
      %s345 = sphi 0, %s344
      %s361 = sphi 0, %s345
      %s367 = sphi 0, %s369
      %s370 = sphi 0, %s367
      %s371 = sphi 0, %s370
      %s387 = sphi 0, %s371
      %s393 = sphi 0, %s395
      %s396 = sphi 0, %s393
      %s397 = sphi 0, %s396
      %s413 = sphi 0, %s397
      %s421 = sphi 0, %s423
      %s424 = sphi 0, %s421
      %s425 = sphi 0, %s424
      %s441 = sphi 0, %s425
    $region4: #{tpu_custom_call.1} parent=1 // loop_header_branch
      %36 = sbr.rel (%p34) target = $region8
    $region5: #{tpu_custom_call.1} parent=1 // loop_body
      %s38 = ssub.s32 %s33, 1
      %s39 = ssub.s32 %s33, 2
      %s46 = sadd.s32 1, %s41
      %p47 = scmp.ge.s32.totalorder %s46, 2
      %s48 = scalar_select %p47, 0, %s46
      %s49 = sadd.s32 1, %s40
      %s50 = scalar_select %p47, %s49, %s40
      %p51 = scmp.ge.s32.totalorder %s50, 2
      %s52 = scalar_select %p51, 0, %s50
      %s53 = ssub.s32 %s40, %s52
      %p54 = scmp.eq.s32.totalorder %s53, 0
      %s56 = sadd.s32 %s55, 1
      %s57 = scalar_select %p54, %s55, %s56
      %p60 = pneg %p54
      %p61 = scmp.eq.s32.totalorder %s33, 3
      %p62 = por %p60, %p61
      %p63 = scmp.ne.s32.totalorder %s55, %s58
      %p64 = scmp.eq.s32.totalorder %s33, 0
      %p65 = por %p63, %p64
      %p66 = scmp.ne.s32.totalorder %s55, %s58
      %p67 = scmp.eq.s32.totalorder %s38, 3
      %p68 = por %p66, %p67
      %p69 = scmp.ne.s32.totalorder %s58, %s59
      %p70 = scmp.eq.s32.totalorder %s38, 0
      %p71 = por %p69, %p70
      %p72 = scmp.ne.s32.totalorder %s58, %s59
      %p73 = scmp.eq.s32.totalorder %s39, 3
      %p74 = por %p72, %p73
      %p76 = scmp.ne.s32.totalorder %s59, %s75
      %p77 = scmp.eq.s32.totalorder %s39, 0
      %p78 = por %p76, %p77
      %s79 = ssub.s32 %s41, %s48
      %p80 = scmp.eq.s32.totalorder %s79, 0
      %s82 = sadd.s32 %s81, 1
      %s83 = scalar_select %p80, %s81, %s82
      %p86 = pneg %p80
      %p87 = scmp.eq.s32.totalorder %s33, 3
      %p88 = por %p86, %p87
      %p89 = scmp.ne.s32.totalorder %s81, %s84
      %p90 = scmp.eq.s32.totalorder %s33, 0
      %p91 = por %p89, %p90
      %p92 = scmp.ne.s32.totalorder %s81, %s84
      %p93 = scmp.eq.s32.totalorder %s38, 3
      %p94 = por %p92, %p93
      %p95 = scmp.ne.s32.totalorder %s84, %s85
      %p96 = scmp.eq.s32.totalorder %s38, 0
      %p97 = por %p95, %p96
      %p98 = scmp.ne.s32.totalorder %s84, %s85
      %p99 = scmp.eq.s32.totalorder %s39, 3
      %p100 = por %p98, %p99
      %p102 = scmp.ne.s32.totalorder %s85, %s101
      %p103 = scmp.eq.s32.totalorder %s39, 0
      %p104 = por %p102, %p103
      %s105 = ssub.s32 %s41, %s48
      %p106 = scmp.eq.s32.totalorder %s105, 0
      %s108 = sadd.s32 %s107, 1
      %s109 = scalar_select %p106, %s107, %s108
      %p112 = pneg %p106
      %p113 = scmp.eq.s32.totalorder %s33, 3
      %p114 = por %p112, %p113
      %p115 = scmp.ne.s32.totalorder %s107, %s110
      %p116 = scmp.eq.s32.totalorder %s33, 0
      %p117 = por %p115, %p116
      %p118 = scmp.ne.s32.totalorder %s107, %s110
      %p119 = scmp.eq.s32.totalorder %s38, 3
      %p120 = por %p118, %p119
      %p121 = scmp.ne.s32.totalorder %s110, %s111
      %p122 = scmp.eq.s32.totalorder %s38, 0
      %p123 = por %p121, %p122
      %p124 = scmp.ne.s32.totalorder %s110, %s111
      %p125 = scmp.eq.s32.totalorder %s39, 3
      %p126 = por %p124, %p125
      %p128 = scmp.ne.s32.totalorder %s111, %s127
      %p129 = scmp.eq.s32.totalorder %s39, 0
      %p130 = por %p128, %p129
      %s131 = ssub.s32 %s41, %s48
      %p132 = scmp.eq.s32.totalorder %s131, 0
      %s134 = sadd.s32 %s133, 1
      %s135 = scalar_select %p132, %s133, %s134
      %p138 = pneg %p132
      %p139 = scmp.eq.s32.totalorder %s33, 3
      %p140 = por %p138, %p139
      %p141 = scmp.ne.s32.totalorder %s133, %s136
      %p142 = scmp.eq.s32.totalorder %s33, 0
      %p143 = por %p141, %p142
      %p144 = scmp.ne.s32.totalorder %s133, %s136
      %p145 = scmp.eq.s32.totalorder %s38, 3
      %p146 = por %p144, %p145
      %p147 = scmp.ne.s32.totalorder %s136, %s137
      %p148 = scmp.eq.s32.totalorder %s38, 0
      %p149 = por %p147, %p148
      %p150 = scmp.ne.s32.totalorder %s136, %s137
      %p151 = scmp.eq.s32.totalorder %s39, 3
      %p152 = por %p150, %p151
      %p154 = scmp.ne.s32.totalorder %s137, %s153
      %p155 = scmp.eq.s32.totalorder %s39, 0
      %p156 = por %p154, %p155
      %s157 = ssub.s32 %s41, %s48
      %p158 = scmp.eq.s32.totalorder %s157, 0
      %s160 = sadd.s32 %s159, 1
      %s161 = scalar_select %p158, %s159, %s160
      %p164 = pneg %p158
      %p165 = scmp.eq.s32.totalorder %s33, 3
      %p166 = por %p164, %p165
      %p167 = scmp.ne.s32.totalorder %s159, %s162
      %p168 = scmp.eq.s32.totalorder %s33, 0
      %p169 = por %p167, %p168
      %p170 = scmp.ne.s32.totalorder %s159, %s162
      %p171 = scmp.eq.s32.totalorder %s38, 3
      %p172 = por %p170, %p171
      %p173 = scmp.ne.s32.totalorder %s162, %s163
      %p174 = scmp.eq.s32.totalorder %s38, 0
      %p175 = por %p173, %p174
      %p176 = scmp.ne.s32.totalorder %s162, %s163
      %p177 = scmp.eq.s32.totalorder %s39, 3
      %p178 = por %p176, %p177
      %p180 = scmp.ne.s32.totalorder %s163, %s179
      %p181 = scmp.eq.s32.totalorder %s39, 0
      %p182 = por %p180, %p181
      %s183 = ssub.s32 %s41, %s48
      %p184 = scmp.eq.s32.totalorder %s183, 0
      %s186 = sadd.s32 %s185, 1
      %s187 = scalar_select %p184, %s185, %s186
      %p190 = pneg %p184
      %p191 = scmp.eq.s32.totalorder %s33, 3
      %p192 = por %p190, %p191
      %p193 = scmp.ne.s32.totalorder %s185, %s188
      %p194 = scmp.eq.s32.totalorder %s33, 0
      %p195 = por %p193, %p194
      %p196 = scmp.ne.s32.totalorder %s185, %s188
      %p197 = scmp.eq.s32.totalorder %s38, 3
      %p198 = por %p196, %p197
      %p199 = scmp.ne.s32.totalorder %s188, %s189
      %p200 = scmp.eq.s32.totalorder %s38, 0
      %p201 = por %p199, %p200
      %p202 = scmp.ne.s32.totalorder %s188, %s189
      %p203 = scmp.eq.s32.totalorder %s39, 3
      %p204 = por %p202, %p203
      %p206 = scmp.ne.s32.totalorder %s189, %s205
      %p207 = scmp.eq.s32.totalorder %s39, 0
      %p208 = por %p206, %p207
      %s209 = ssub.s32 %s41, %s48
      %p210 = scmp.eq.s32.totalorder %s209, 0
      %s212 = sadd.s32 %s211, 1
      %s213 = scalar_select %p210, %s211, %s212
      %p216 = pneg %p210
      %p217 = scmp.eq.s32.totalorder %s33, 3
      %p218 = por %p216, %p217
      %p219 = scmp.ne.s32.totalorder %s211, %s214
      %p220 = scmp.eq.s32.totalorder %s33, 0
      %p221 = por %p219, %p220
      %p222 = scmp.ne.s32.totalorder %s211, %s214
      %p223 = scmp.eq.s32.totalorder %s38, 3
      %p224 = por %p222, %p223
      %p225 = scmp.ne.s32.totalorder %s214, %s215
      %p226 = scmp.eq.s32.totalorder %s38, 0
      %p227 = por %p225, %p226
      %p228 = scmp.ne.s32.totalorder %s214, %s215
      %p229 = scmp.eq.s32.totalorder %s39, 3
      %p230 = por %p228, %p229
      %p232 = scmp.ne.s32.totalorder %s215, %s231
      %p233 = scmp.eq.s32.totalorder %s39, 0
      %p234 = por %p232, %p233
      %s235 = ssub.s32 %s41, %s48
      %p236 = scmp.eq.s32.totalorder %s235, 0
      %s238 = sadd.s32 %s237, 1
      %s239 = scalar_select %p236, %s237, %s238
      %p242 = pneg %p236
      %p243 = scmp.eq.s32.totalorder %s33, 3
      %p244 = por %p242, %p243
      %p245 = scmp.ne.s32.totalorder %s237, %s240
      %p246 = scmp.eq.s32.totalorder %s33, 0
      %p247 = por %p245, %p246
      %p248 = scmp.ne.s32.totalorder %s237, %s240
      %p249 = scmp.eq.s32.totalorder %s38, 3
      %p250 = por %p248, %p249
      %p251 = scmp.ne.s32.totalorder %s240, %s241
      %p252 = scmp.eq.s32.totalorder %s38, 0
      %p253 = por %p251, %p252
      %p254 = scmp.ne.s32.totalorder %s240, %s241
      %p255 = scmp.eq.s32.totalorder %s39, 3
      %p256 = por %p254, %p255
      %p258 = scmp.ne.s32.totalorder %s241, %s257
      %p259 = scmp.eq.s32.totalorder %s39, 0
      %p260 = por %p258, %p259
      %s261 = ssub.s32 %s41, %s48
      %p262 = scmp.eq.s32.totalorder %s261, 0
      %s264 = sadd.s32 %s263, 1
      %s265 = scalar_select %p262, %s263, %s264
      %p268 = pneg %p262
      %p269 = scmp.eq.s32.totalorder %s33, 3
      %p270 = por %p268, %p269
      %p271 = scmp.ne.s32.totalorder %s263, %s266
      %p272 = scmp.eq.s32.totalorder %s33, 0
      %p273 = por %p271, %p272
      %p274 = scmp.ne.s32.totalorder %s263, %s266
      %p275 = scmp.eq.s32.totalorder %s38, 3
      %p276 = por %p274, %p275
      %p277 = scmp.ne.s32.totalorder %s266, %s267
      %p278 = scmp.eq.s32.totalorder %s38, 0
      %p279 = por %p277, %p278
      %p280 = scmp.ne.s32.totalorder %s266, %s267
      %p281 = scmp.eq.s32.totalorder %s39, 3
      %p282 = por %p280, %p281
      %p284 = scmp.ne.s32.totalorder %s267, %s283
      %p285 = scmp.eq.s32.totalorder %s39, 0
      %p286 = por %p284, %p285
      %s287 = ssub.s32 %s41, %s48
      %p288 = scmp.eq.s32.totalorder %s287, 0
      %s290 = sadd.s32 %s289, 1
      %s291 = scalar_select %p288, %s289, %s290
      %p294 = pneg %p288
      %p295 = scmp.eq.s32.totalorder %s33, 3
      %p296 = por %p294, %p295
      %p297 = scmp.ne.s32.totalorder %s289, %s292
      %p298 = scmp.eq.s32.totalorder %s33, 0
      %p299 = por %p297, %p298
      %p300 = scmp.ne.s32.totalorder %s289, %s292
      %p301 = scmp.eq.s32.totalorder %s38, 3
      %p302 = por %p300, %p301
      %p303 = scmp.ne.s32.totalorder %s292, %s293
      %p304 = scmp.eq.s32.totalorder %s38, 0
      %p305 = por %p303, %p304
      %p306 = scmp.ne.s32.totalorder %s292, %s293
      %p307 = scmp.eq.s32.totalorder %s39, 3
      %p308 = por %p306, %p307
      %p310 = scmp.ne.s32.totalorder %s293, %s309
      %p311 = scmp.eq.s32.totalorder %s39, 0
      %p312 = por %p310, %p311
      %s313 = ssub.s32 %s41, %s48
      %p314 = scmp.eq.s32.totalorder %s313, 0
      %s316 = sadd.s32 %s315, 1
      %s317 = scalar_select %p314, %s315, %s316
      %p320 = pneg %p314
      %p321 = scmp.eq.s32.totalorder %s33, 3
      %p322 = por %p320, %p321
      %p323 = scmp.ne.s32.totalorder %s315, %s318
      %p324 = scmp.eq.s32.totalorder %s33, 0
      %p325 = por %p323, %p324
      %p326 = scmp.ne.s32.totalorder %s315, %s318
      %p327 = scmp.eq.s32.totalorder %s38, 3
      %p328 = por %p326, %p327
      %p329 = scmp.ne.s32.totalorder %s318, %s319
      %p330 = scmp.eq.s32.totalorder %s38, 0
      %p331 = por %p329, %p330
      %p332 = scmp.ne.s32.totalorder %s318, %s319
      %p333 = scmp.eq.s32.totalorder %s39, 3
      %p334 = por %p332, %p333
      %p336 = scmp.ne.s32.totalorder %s319, %s335
      %p337 = scmp.eq.s32.totalorder %s39, 0
      %p338 = por %p336, %p337
      %s339 = ssub.s32 %s41, %s48
      %p340 = scmp.eq.s32.totalorder %s339, 0
      %s342 = sadd.s32 %s341, 1
      %s343 = scalar_select %p340, %s341, %s342
      %p346 = pneg %p340
      %p347 = scmp.eq.s32.totalorder %s33, 3
      %p348 = por %p346, %p347
      %p349 = scmp.ne.s32.totalorder %s341, %s344
      %p350 = scmp.eq.s32.totalorder %s33, 0
      %p351 = por %p349, %p350
      %p352 = scmp.ne.s32.totalorder %s341, %s344
      %p353 = scmp.eq.s32.totalorder %s38, 3
      %p354 = por %p352, %p353
      %p355 = scmp.ne.s32.totalorder %s344, %s345
      %p356 = scmp.eq.s32.totalorder %s38, 0
      %p357 = por %p355, %p356
      %p358 = scmp.ne.s32.totalorder %s344, %s345
      %p359 = scmp.eq.s32.totalorder %s39, 3
      %p360 = por %p358, %p359
      %p362 = scmp.ne.s32.totalorder %s345, %s361
      %p363 = scmp.eq.s32.totalorder %s39, 0
      %p364 = por %p362, %p363
      %s365 = ssub.s32 %s41, %s48
      %p366 = scmp.eq.s32.totalorder %s365, 0
      %s368 = sadd.s32 %s367, 1
      %s369 = scalar_select %p366, %s367, %s368
      %p372 = pneg %p366
      %p373 = scmp.eq.s32.totalorder %s33, 3
      %p374 = por %p372, %p373
      %p375 = scmp.ne.s32.totalorder %s367, %s370
      %p376 = scmp.eq.s32.totalorder %s33, 0
      %p377 = por %p375, %p376
      %p378 = scmp.ne.s32.totalorder %s367, %s370
      %p379 = scmp.eq.s32.totalorder %s38, 3
      %p380 = por %p378, %p379
      %p381 = scmp.ne.s32.totalorder %s370, %s371
      %p382 = scmp.eq.s32.totalorder %s38, 0
      %p383 = por %p381, %p382
      %p384 = scmp.ne.s32.totalorder %s370, %s371
      %p385 = scmp.eq.s32.totalorder %s39, 3
      %p386 = por %p384, %p385
      %p388 = scmp.ne.s32.totalorder %s371, %s387
      %p389 = scmp.eq.s32.totalorder %s39, 0
      %p390 = por %p388, %p389
      %s391 = ssub.s32 %s40, %s52
      %p392 = scmp.eq.s32.totalorder %s391, 0
      %s394 = sadd.s32 %s393, 1
      %s395 = scalar_select %p392, %s393, %s394
      %p398 = pneg %p392
      %p399 = scmp.eq.s32.totalorder %s33, 3
      %p400 = por %p398, %p399
      %p401 = scmp.ne.s32.totalorder %s393, %s396
      %p402 = scmp.eq.s32.totalorder %s33, 0
      %p403 = por %p401, %p402
      %p404 = scmp.ne.s32.totalorder %s393, %s396
      %p405 = scmp.eq.s32.totalorder %s38, 3
      %p406 = por %p404, %p405
      %p407 = scmp.ne.s32.totalorder %s396, %s397
      %p408 = scmp.eq.s32.totalorder %s38, 0
      %p409 = por %p407, %p408
      %p410 = scmp.ne.s32.totalorder %s396, %s397
      %p411 = scmp.eq.s32.totalorder %s39, 3
      %p412 = por %p410, %p411
      %p414 = scmp.ne.s32.totalorder %s397, %s413
      %p415 = scmp.eq.s32.totalorder %s39, 0
      %p416 = por %p414, %p415
      %s417 = ssub.s32 %s41, %s48
      %s418 = ssub.s32 %s40, %s52
      %s419 = sor.u32 %s417, %s418
      %p420 = scmp.eq.s32.totalorder %s419, 0
      %s422 = sadd.s32 %s421, 1
      %s423 = scalar_select %p420, %s421, %s422
      %p426 = pneg %p420
      %p427 = scmp.eq.s32.totalorder %s33, 3
      %p428 = por %p426, %p427
      %p429 = scmp.ne.s32.totalorder %s421, %s424
      %p430 = scmp.eq.s32.totalorder %s33, 0
      %p431 = por %p429, %p430
      %p432 = scmp.ne.s32.totalorder %s421, %s424
      %p433 = scmp.eq.s32.totalorder %s38, 3
      %p434 = por %p432, %p433
      %p435 = scmp.ne.s32.totalorder %s424, %s425
      %p436 = scmp.eq.s32.totalorder %s38, 0
      %p437 = por %p435, %p436
      %p438 = scmp.ne.s32.totalorder %s424, %s425
      %p439 = scmp.eq.s32.totalorder %s39, 3
      %p440 = por %p438, %p439
      %p442 = scmp.ne.s32.totalorder %s425, %s441
      %p443 = scmp.eq.s32.totalorder %s39, 0
      %p444 = por %p442, %p443
      %p445 = scmp.le.s32.totalorder 1, %s33
      %p446 = scmp.lt.s32.totalorder %s33, 5
      %p447 = pnand %p445, %p446
      %p448 = pneg %p447
      // Predicated region
      $region9: #{tpu_custom_call.1} parent=5 // pred_check
        _
      $region10: #{tpu_custom_call.1} parent=5 // pred_check_branch
        %450 = sbr.rel (%p447) target = $region12
      $region11: #{tpu_custom_call.1} parent=5 // pred_region
        %s451 = ssub.s32 %s33, 1
      $region12: #{tpu_custom_call.1} parent=5 // pred_fallthru
        _
      %p452 = scmp.lt.s32.totalorder %s33, 4
      // Predicated region
      $region13: #{tpu_custom_call.1} parent=5 // pred_check
        %p453 = pneg %p452
      $region14: #{tpu_custom_call.1} parent=5 // pred_check_branch
        %455 = sbr.rel (%p453) target = $region16
      $region15: #{tpu_custom_call.1} parent=5 // pred_region
        // Predicated region
        $region17: #{tpu_custom_call.1} parent=15 // pred_check
          %p456 = pneg %p65
        $region18: #{tpu_custom_call.1} parent=15 // pred_check_branch
          %458 = sbr.rel (%p456) target = $region20
        $region19: #{tpu_custom_call.1} parent=15 // pred_region
          %s459 = sand.u32 %s55, 1
          %s460 = scalar_lea.sflag [#allocation4], %s459
          %s461 = sand.u32 %s55, 1
          %s462 = smul.addr %s461, 8
          %s463 = scalar_lea.vmem [#allocation3], %s462
          %s465 = ssub.s32 128, 128
          %466 = vsyncadd %s460, %s465
          %s467 = smul.addr %s40, 128
          %s468 = scalar_lea.hbm %s0, %s467
          %s470 = sshll.u32 %s463, 4
          %s471 = int_to_ptr.vmem [resolvable:$true] %s470
          %473 = dma.hbm_to_vmem [thread:$0]  %s468, 128, %s471, %s460
        $region20: #{tpu_custom_call.1} parent=15 // pred_fallthru
          _
        // Predicated region
        $region21: #{tpu_custom_call.1} parent=15 // pred_check
          %p474 = pneg %p91
        $region22: #{tpu_custom_call.1} parent=15 // pred_check_branch
          %476 = sbr.rel (%p474) target = $region24
        $region23: #{tpu_custom_call.1} parent=15 // pred_region
          %s477 = sand.u32 %s81, 1
          %s478 = scalar_lea.sflag [#allocation7], %s477
          %s479 = sand.u32 %s81, 1
          %s480 = scalar_lea.vmem [#allocation6], %s479
          %s482 = ssub.s32 16, 16
          %483 = vsyncadd %s478, %s482
          %s484 = smul.addr %s41, 16
          %s485 = scalar_lea.hbm %s1, %s484
          %s487 = sshll.u32 %s480, 4
          %s488 = int_to_ptr.vmem [resolvable:$true] %s487
          %490 = dma.hbm_to_vmem [thread:$0]  %s485, 16, %s488, %s478
        $region24: #{tpu_custom_call.1} parent=15 // pred_fallthru
          _
        // Predicated region
        $region25: #{tpu_custom_call.1} parent=15 // pred_check
          %p491 = pneg %p117
        $region26: #{tpu_custom_call.1} parent=15 // pred_check_branch
          %493 = sbr.rel (%p491) target = $region28
        $region27: #{tpu_custom_call.1} parent=15 // pred_region
          %p494 = scmp.lt.s32.totalorder %s41, 1
          %s495 = scalar_select %p494, %s41, 1
          %s496 = scalar_lea.vmem %s2, %s495
        $region28: #{tpu_custom_call.1} parent=15 // pred_fallthru
          _
        // Predicated region
        $region29: #{tpu_custom_call.1} parent=15 // pred_check
          %p497 = pneg %p143
        $region30: #{tpu_custom_call.1} parent=15 // pred_check_branch
          %499 = sbr.rel (%p497) target = $region32
        $region31: #{tpu_custom_call.1} parent=15 // pred_region
          %p500 = scmp.lt.s32.totalorder %s41, 1
          %s501 = scalar_select %p500, %s41, 1
          %s502 = smul.addr %s501, 4
          %s503 = smul.addr %s502, 4
          %s504 = scalar_lea.vmem %s3, %s503
        $region32: #{tpu_custom_call.1} parent=15 // pred_fallthru
          _
        // Predicated region
        $region33: #{tpu_custom_call.1} parent=15 // pred_check
          %p505 = pneg %p169
        $region34: #{tpu_custom_call.1} parent=15 // pred_check_branch
          %507 = sbr.rel (%p505) target = $region36
        $region35: #{tpu_custom_call.1} parent=15 // pred_region
          %p508 = scmp.lt.s32.totalorder %s41, 1
          %s509 = scalar_select %p508, %s41, 1
          %s510 = scalar_lea.vmem %s4, %s509
        $region36: #{tpu_custom_call.1} parent=15 // pred_fallthru
          _
        // Predicated region
        $region37: #{tpu_custom_call.1} parent=15 // pred_check
          %p511 = pneg %p195
        $region38: #{tpu_custom_call.1} parent=15 // pred_check_branch
          %513 = sbr.rel (%p511) target = $region40
        $region39: #{tpu_custom_call.1} parent=15 // pred_region
          %p514 = scmp.lt.s32.totalorder %s41, 1
          %s515 = scalar_select %p514, %s41, 1
          %s516 = smul.addr %s515, 4
          %s517 = smul.addr %s516, 4
          %s518 = scalar_lea.vmem %s5, %s517
        $region40: #{tpu_custom_call.1} parent=15 // pred_fallthru
          _
        // Predicated region
        $region41: #{tpu_custom_call.1} parent=15 // pred_check
          %p519 = pneg %p221
        $region42: #{tpu_custom_call.1} parent=15 // pred_check_branch
          %521 = sbr.rel (%p519) target = $region44
        $region43: #{tpu_custom_call.1} parent=15 // pred_region
          %p522 = scmp.lt.s32.totalorder %s41, 1
          %s523 = scalar_select %p522, %s41, 1
          %s524 = scalar_lea.vmem %s6, %s523
        $region44: #{tpu_custom_call.1} parent=15 // pred_fallthru
          _
        // Predicated region
        $region45: #{tpu_custom_call.1} parent=15 // pred_check
          %p525 = pneg %p247
        $region46: #{tpu_custom_call.1} parent=15 // pred_check_branch
          %527 = sbr.rel (%p525) target = $region48
        $region47: #{tpu_custom_call.1} parent=15 // pred_region
          %p528 = scmp.lt.s32.totalorder %s41, 1
          %s529 = scalar_select %p528, %s41, 1
          %s530 = scalar_lea.vmem %s7, %s529
        $region48: #{tpu_custom_call.1} parent=15 // pred_fallthru
          _
        // Predicated region
        $region49: #{tpu_custom_call.1} parent=15 // pred_check
          %p531 = pneg %p273
        $region50: #{tpu_custom_call.1} parent=15 // pred_check_branch
          %533 = sbr.rel (%p531) target = $region52
        $region51: #{tpu_custom_call.1} parent=15 // pred_region
          %p534 = scmp.lt.s32.totalorder %s41, 1
          %s535 = scalar_select %p534, %s41, 1
          %s536 = scalar_lea.vmem %s8, %s535
        $region52: #{tpu_custom_call.1} parent=15 // pred_fallthru
          _
        // Predicated region
        $region53: #{tpu_custom_call.1} parent=15 // pred_check
          %p537 = pneg %p299
        $region54: #{tpu_custom_call.1} parent=15 // pred_check_branch
          %539 = sbr.rel (%p537) target = $region56
        $region55: #{tpu_custom_call.1} parent=15 // pred_region
          %p540 = scmp.lt.s32.totalorder %s41, 1
          %s541 = scalar_select %p540, %s41, 1
          %s542 = smul.addr %s541, 4
          %s543 = smul.addr %s542, 4
          %s544 = scalar_lea.vmem %s9, %s543
        $region56: #{tpu_custom_call.1} parent=15 // pred_fallthru
          _
        // Predicated region
        $region57: #{tpu_custom_call.1} parent=15 // pred_check
          %p545 = pneg %p325
        $region58: #{tpu_custom_call.1} parent=15 // pred_check_branch
          %547 = sbr.rel (%p545) target = $region60
        $region59: #{tpu_custom_call.1} parent=15 // pred_region
          %p548 = scmp.lt.s32.totalorder %s41, 1
          %s549 = scalar_select %p548, %s41, 1
          %s550 = scalar_lea.vmem %s10, %s549
        $region60: #{tpu_custom_call.1} parent=15 // pred_fallthru
          _
        // Predicated region
        $region61: #{tpu_custom_call.1} parent=15 // pred_check
          %p551 = pneg %p351
        $region62: #{tpu_custom_call.1} parent=15 // pred_check_branch
          %553 = sbr.rel (%p551) target = $region64
        $region63: #{tpu_custom_call.1} parent=15 // pred_region
          %p554 = scmp.lt.s32.totalorder %s41, 1
          %s555 = scalar_select %p554, %s41, 1
          %s556 = smul.addr %s555, 8
          %s557 = smul.addr %s556, 4
          %s558 = scalar_lea.vmem %s11, %s557
        $region64: #{tpu_custom_call.1} parent=15 // pred_fallthru
          _
        // Predicated region
        $region65: #{tpu_custom_call.1} parent=15 // pred_check
          %p559 = pneg %p377
        $region66: #{tpu_custom_call.1} parent=15 // pred_check_branch
          %561 = sbr.rel (%p559) target = $region68
        $region67: #{tpu_custom_call.1} parent=15 // pred_region
          %p562 = scmp.lt.s32.totalorder %s41, 1
          %s563 = scalar_select %p562, %s41, 1
          %s564 = scalar_lea.vmem %s12, %s563
        $region68: #{tpu_custom_call.1} parent=15 // pred_fallthru
          _
      $region16: #{tpu_custom_call.1} parent=5 // pred_fallthru
        _
      %p565 = scmp.le.s32.totalorder 1, %s33
      %p566 = scmp.lt.s32.totalorder %s33, 5
      %p567 = pnand %p565, %p566
      %p568 = pneg %p567
      // Predicated region
      $region69: #{tpu_custom_call.1} parent=5 // pred_check
        _
      $region70: #{tpu_custom_call.1} parent=5 // pred_check_branch
        %570 = sbr.rel (%p567) target = $region72
      $region71: #{tpu_custom_call.1} parent=5 // pred_region
        %s571 = ssub.s32 %s33, 1
        %s572 = sand.u32 %s58, 1
        %s573 = scalar_lea.sflag [#allocation4], %s572
        %s574 = sand.u32 %s58, 1
        %s575 = smul.addr %s574, 8
        %s576 = scalar_lea.vmem [#allocation3], %s575
        // Predicated region
        $region73: #{tpu_custom_call.1} parent=71 // pred_check
          %p577 = pneg %p71
        $region74: #{tpu_custom_call.1} parent=71 // pred_check_branch
          %579 = sbr.rel (%p577) target = $region76
        $region75: #{tpu_custom_call.1} parent=71 // pred_region
          %580 = dma.done %s573, 128
        $region76: #{tpu_custom_call.1} parent=71 // pred_fallthru
          _
        %s581 = sand.u32 %s84, 1
        %s582 = scalar_lea.sflag [#allocation7], %s581
        %s583 = sand.u32 %s84, 1
        %s584 = scalar_lea.vmem [#allocation6], %s583
        // Predicated region
        $region77: #{tpu_custom_call.1} parent=71 // pred_check
          %p585 = pneg %p97
        $region78: #{tpu_custom_call.1} parent=71 // pred_check_branch
          %587 = sbr.rel (%p585) target = $region80
        $region79: #{tpu_custom_call.1} parent=71 // pred_region
          %588 = dma.done %s582, 16
        $region80: #{tpu_custom_call.1} parent=71 // pred_fallthru
          _
        %s589 = sand.u32 %s58, 1
        %s590 = scalar_lea.sflag [#allocation4], %s589
        %s591 = sand.u32 %s58, 1
        %s592 = smul.addr %s591, 8
        %s593 = scalar_lea.vmem [#allocation3], %s592
        %p594 = pneg %p71
        %p595 = pneg %p68
        %s596 = sand.u32 %s84, 1
        %s597 = scalar_lea.sflag [#allocation7], %s596
        %s598 = sand.u32 %s84, 1
        %s599 = scalar_lea.vmem [#allocation6], %s598
        %p600 = pneg %p97
        %p601 = pneg %p94
        %p602 = scmp.lt.s32.totalorder %s43, 1
        %s603 = scalar_select %p602, %s43, 1
        %s604 = scalar_lea.vmem %s2, %s603
        %p605 = pneg %p123
        %p606 = pneg %p120
        %p607 = scmp.lt.s32.totalorder %s43, 1
        %s608 = scalar_select %p607, %s43, 1
        %s609 = smul.addr %s608, 4
        %s610 = smul.addr %s609, 4
        %s611 = scalar_lea.vmem %s3, %s610
        %p612 = pneg %p149
        %p613 = pneg %p146
        %p614 = scmp.lt.s32.totalorder %s43, 1
        %s615 = scalar_select %p614, %s43, 1
        %s616 = scalar_lea.vmem %s4, %s615
        %p617 = pneg %p175
        %p618 = pneg %p172
        %p619 = scmp.lt.s32.totalorder %s43, 1
        %s620 = scalar_select %p619, %s43, 1
        %s621 = smul.addr %s620, 4
        %s622 = smul.addr %s621, 4
        %s623 = scalar_lea.vmem %s5, %s622
        %p624 = pneg %p201
        %p625 = pneg %p198
        %p626 = scmp.lt.s32.totalorder %s43, 1
        %s627 = scalar_select %p626, %s43, 1
        %s628 = scalar_lea.vmem %s6, %s627
        %p629 = pneg %p227
        %p630 = pneg %p224
        %p631 = scmp.lt.s32.totalorder %s43, 1
        %s632 = scalar_select %p631, %s43, 1
        %s633 = scalar_lea.vmem %s7, %s632
        %p634 = pneg %p253
        %p635 = pneg %p250
        %p636 = scmp.lt.s32.totalorder %s43, 1
        %s637 = scalar_select %p636, %s43, 1
        %s638 = scalar_lea.vmem %s8, %s637
        %p639 = pneg %p279
        %p640 = pneg %p276
        %p641 = scmp.lt.s32.totalorder %s43, 1
        %s642 = scalar_select %p641, %s43, 1
        %s643 = smul.addr %s642, 4
        %s644 = smul.addr %s643, 4
        %s645 = scalar_lea.vmem %s9, %s644
        %p646 = pneg %p305
        %p647 = pneg %p302
        %p648 = scmp.lt.s32.totalorder %s43, 1
        %s649 = scalar_select %p648, %s43, 1
        %s650 = scalar_lea.vmem %s10, %s649
        %p651 = pneg %p331
        %p652 = pneg %p328
        %p653 = scmp.lt.s32.totalorder %s43, 1
        %s654 = scalar_select %p653, %s43, 1
        %s655 = smul.addr %s654, 8
        %s656 = smul.addr %s655, 4
        %s657 = scalar_lea.vmem %s11, %s656
        %p658 = pneg %p357
        %p659 = pneg %p354
        %p660 = scmp.lt.s32.totalorder %s43, 1
        %s661 = scalar_select %p660, %s43, 1
        %s662 = scalar_lea.vmem %s12, %s661
        %p663 = pneg %p383
        %p664 = pneg %p380
        %p665 = pneg %p409
        %p666 = pneg %p406
        %s667 = sand.u32 %s396, 1
        %s668 = scalar_lea.sflag [#allocation5], %s667
        %s669 = sand.u32 %s396, 1
        %s670 = smul.addr %s669, 8
        %s671 = scalar_lea.vmem [#allocation8], %s670
        %p672 = pneg %p437
        %p673 = pneg %p434
        %s674 = sand.u32 %s424, 1
        %s675 = scalar_lea.sflag [#allocation10], %s674
        %s676 = sand.u32 %s424, 1
        %s677 = smul.addr %s676, 32
        %s678 = scalar_lea.vmem [#allocation9], %s677
        %p679 = scmp.lt.s32.totalorder %s43, 1
        %s680 = scalar_select %p679, %s43, 1
        %s681 = scalar_lea.vmem %s2, %s680
        %p682 = scmp.lt.s32.totalorder %s43, 1
        %s683 = scalar_select %p682, %s43, 1
        %s684 = smul.addr %s683, 4
        %s685 = smul.addr %s684, 4
        %s686 = scalar_lea.vmem %s3, %s685
        %p687 = scmp.lt.s32.totalorder %s43, 1
        %s688 = scalar_select %p687, %s43, 1
        %s689 = scalar_lea.vmem %s4, %s688
        %p690 = scmp.lt.s32.totalorder %s43, 1
        %s691 = scalar_select %p690, %s43, 1
        %s692 = smul.addr %s691, 4
        %s693 = smul.addr %s692, 4
        %s694 = scalar_lea.vmem %s5, %s693
        %p695 = scmp.lt.s32.totalorder %s43, 1
        %s696 = scalar_select %p695, %s43, 1
        %s697 = scalar_lea.vmem %s6, %s696
        %p698 = scmp.lt.s32.totalorder %s43, 1
        %s699 = scalar_select %p698, %s43, 1
        %s700 = scalar_lea.vmem %s7, %s699
        %p701 = scmp.lt.s32.totalorder %s43, 1
        %s702 = scalar_select %p701, %s43, 1
        %s703 = scalar_lea.vmem %s8, %s702
        %p704 = scmp.lt.s32.totalorder %s43, 1
        %s705 = scalar_select %p704, %s43, 1
        %s706 = smul.addr %s705, 4
        %s707 = smul.addr %s706, 4
        %s708 = scalar_lea.vmem %s9, %s707
        %p709 = scmp.lt.s32.totalorder %s43, 1
        %s710 = scalar_select %p709, %s43, 1
        %s711 = scalar_lea.vmem %s10, %s710
        %p712 = scmp.lt.s32.totalorder %s43, 1
        %s713 = scalar_select %p712, %s43, 1
        %s714 = smul.addr %s713, 8
        %s715 = smul.addr %s714, 4
        %s716 = scalar_lea.vmem %s11, %s715
        %p717 = scmp.lt.s32.totalorder %s43, 1
        %s718 = scalar_select %p717, %s43, 1
        %s719 = scalar_lea.vmem %s12, %s718
        %p721 = scmp.eq.s32.totalorder %s43, 0
        // Predicated region
        $region81: #{tpu_custom_call.1} parent=71 // pred_check
          %p722 = pneg %p721
        $region82: #{tpu_custom_call.1} parent=71 // pred_check_branch
          %724 = sbr.rel (%p722) target = $region84
        $region83: #{tpu_custom_call.1} parent=71 // pred_region
          %v725 = vld [vmem:[%s576] sm:$0xff]
          %vm726 = vcmask 261120
          %727 = vst.msk [vmem:[#allocation2] sm:$0xff] %vm726, %v725
        $region84: #{tpu_custom_call.1} parent=71 // pred_fallthru
          _
        %v728 = vld [vmem:[#allocation2] sm:$0xff]
        %v729 = vld [vmem:[%s584] sm:$0x1]
        %v730 = vld [vmem:[%s681] sm:$0x1]
        %vm731 = vcmask 261120
        %v732 = vsel %vm731, %v728, 0.0
        %733 = vadd.xlane.f32.xlu0 %v732
        %v734 = vpop.xlane.xlu0 %733
        %v735 = vrcp.pop 32.0
        %v736 = vmul.f32 %v734, %v735
        %v737 = vsub.f32 %v728, %v736
        %v738 = vmul.f32 %v737, %v737
        %v739 = vsel %vm731, %v738, 0.0
        %740 = vadd.xlane.f32.xlu0 %v739
        %v741 = vpop.xlane.xlu0 %740
        %v742 = vmul.f32 %v741, %v735
        %v743 = vadd.f32 %v742, 1e-06
        %v744 = vrsqrt.pop %v743
        %v745 = vmul.f32 %v737, %v744
        %v747 = vlaneseq
        %v748 = vshrl.u32 %v747, 7
        %v749 = vsub.s32 0, %v748
        %v750 = vrot.slane %v729, %v749
        %v752 = vmul.f32 %v745, %v750
        %v754 = vlaneseq
        %v755 = vshrl.u32 %v754, 7
        %v756 = vsub.s32 0, %v755
        %v757 = vrot.slane %v730, %v756
        %v759 = vadd.f32 %v752, %v757
        %v760 = vpack.c.bf16 %v759, %v759
        %v761 = vld [vmem:[%s686] sm:$0xf]
        %v762 = vld [vmem:[%s686 + $0x4] sm:$0xf]
        %v763 = vld [vmem:[%s686 + $0x8] sm:$0xf]
        %v764 = vld [vmem:[%s686 + $0xc] sm:$0xf]
        %v765 = vld [vmem:[%s689] sm:$0x1]
        %v767 = vlaneseq
        %v768 = vshrl.u32 %v767, 7
        %v769 = vsub.s32 0, %v768
        %v770 = vrot.slane %v765, %v769
        %v776 = vunpack.c.l.b16 %v761
        %v777 = vunpack.c.l.b16 %v762
        %v778 = vunpack.c.l.b16 %v763
        %v779 = vunpack.c.l.b16 %v764
        %v780 = vpack.c.b16 %v777, %v776
        %v781 = vpack.c.b16 %v779, %v778
        %v785 = vsel %vm731, %v760, 0
        %787 = vmatprep.subr.bf16.mxu0 0
        %788 = vmatpush1.bf16.msra.mxu0 0
        %789 = vmatprep.subr.bf16.mxu0 0
        %790 = vmatpush1.bf16.msra.mxu0 0
        %791 = vmatprep.subr.bf16.mxu0 0
        %792 = vmatpush1.bf16.msra.mxu0 0
        %793 = vmatprep.subr.bf16.mxu0 0
        %794 = vmatpush1.bf16.msra.mxu0 0
        %795 = vmatprep.subr.bf16.mxu0 0
        %796 = vmatpush1.bf16.msra.mxu0 0
        %797 = vmatprep.subr.bf16.mxu0 0
        %798 = vmatpush1.bf16.msra.mxu0 0
        %799 = vmatprep.subr.bf16.mxu0 0
        %800 = vmatpush1.bf16.msra.mxu0 %v781
        %801 = vmatprep.subr.bf16.mxu0 0
        %802 = vmatpush1.bf16.msra.mxu0 %v780
        %803 = vmatprep.subr.bf16.mxu0 0
        %804 = vmatpush2.bf16.msra.mxu0 0
        %805 = vmatprep.subr.bf16.mxu0 0
        %806 = vmatpush2.bf16.msra.mxu0 0
        %807 = vmatprep.subr.bf16.mxu0 0
        %808 = vmatpush2.bf16.msra.mxu0 0
        %809 = vmatprep.subr.bf16.mxu0 0
        %810 = vmatpush2.bf16.msra.mxu0 0
        %811 = vmatprep.subr.bf16.mxu0 0
        %812 = vmatpush2.bf16.msra.mxu0 0
        %813 = vmatprep.subr.bf16.mxu0 0
        %814 = vmatpush2.bf16.msra.mxu0 0
        %815 = vmatprep.subr.bf16.mxu0 0
        %816 = vmatpush2.bf16.msra.mxu0 0
        %817 = vmatprep.subr.bf16.mxu0 0
        %818 = vmatpush2.bf16.msra.mxu0 0
        %819 = vmatprep.mubr.bf16.mxu0 0
        %820 = vmatmul.mubr.bf16.gmra.mxu0 %v785
        %v821 = vpop.f32.mrf.mxu0
        %v822 = vadd.f32 %v770, %v821
        %v823 = vpop.f32.mrf.mxu0
        %v824 = vpop.f32.mrf.mxu0
        %v825 = vpop.f32.mrf.mxu0
        %826 = vdwg.mxu0
        %828 = vrot.lane.b32.xlu0 %v822, 120
        %v829 = vpop.permute.xlu0 %828
        %831 = vrot.lane.b32.xlu0 %v822, 112
        %v832 = vpop.permute.xlu0 %831
        %834 = vrot.lane.b32.xlu0 %v822, 104
        %v835 = vpop.permute.xlu0 %834
        %v837 = vpack.c.bf16 %v822, %v822
        %v838 = vpack.c.bf16 %v829, %v829
        %v839 = vpack.c.bf16 %v832, %v832
        %v840 = vpack.c.bf16 %v835, %v835
        %842 = vrot.lane.b32.xlu0 %v837, 96
        %v843 = vpop.permute.xlu0 %842
        %vm844 = vcmask 64512
        %v846 = vsel %vm844, %v837, 0
        %v849 = vsel %vm844, %v843, 0
        %851 = vmatprep.subr.bf16.mxu0 0
        %852 = vmatpush1.bf16.xpose.msra.mxu0 0
        %853 = vmatprep.subr.bf16.mxu0 0
        %854 = vmatpush1.bf16.xpose.msra.mxu0 0
        %855 = vmatprep.subr.bf16.mxu0 0
        %856 = vmatpush1.bf16.xpose.msra.mxu0 0
        %857 = vmatprep.subr.bf16.mxu0 0
        %858 = vmatpush1.bf16.xpose.msra.mxu0 0
        %859 = vmatprep.subr.bf16.mxu0 0
        %860 = vmatpush1.bf16.xpose.msra.mxu0 0
        %861 = vmatprep.subr.bf16.mxu0 0
        %862 = vmatpush1.bf16.xpose.msra.mxu0 0
        %863 = vmatprep.subr.bf16.mxu0 0
        %864 = vmatpush1.bf16.xpose.msra.mxu0 0
        %865 = vmatprep.subr.bf16.mxu0 0
        %866 = vmatpush1.bf16.xpose.msra.mxu0 %v849
        %867 = vmatprep.subr.bf16.mxu0 0
        %868 = vmatpush2.bf16.xpose.msra.mxu0 0
        %869 = vmatprep.subr.bf16.mxu0 0
        %870 = vmatpush2.bf16.xpose.msra.mxu0 0
        %871 = vmatprep.subr.bf16.mxu0 0
        %872 = vmatpush2.bf16.xpose.msra.mxu0 0
        %873 = vmatprep.subr.bf16.mxu0 0
        %874 = vmatpush2.bf16.xpose.msra.mxu0 0
        %875 = vmatprep.subr.bf16.mxu0 0
        %876 = vmatpush2.bf16.xpose.msra.mxu0 0
        %877 = vmatprep.subr.bf16.mxu0 0
        %878 = vmatpush2.bf16.xpose.msra.mxu0 0
        %879 = vmatprep.subr.bf16.mxu0 0
        %880 = vmatpush2.bf16.xpose.msra.mxu0 0
        %881 = vmatprep.subr.bf16.mxu0 0
        %882 = vmatpush2.bf16.xpose.msra.mxu0 0
        %883 = vmatprep.mubr.bf16.mxu0 0
        %884 = vmatmul.mubr.bf16.gmra.mxu0 %v846
        %v885 = vpop.f32.mrf.mxu0
        %v886 = vadd.f32 0.0, %v885
        %v887 = vpop.f32.mrf.mxu0
        %v888 = vpop.f32.mrf.mxu0
        %v889 = vpop.f32.mrf.mxu0
        %890 = vdwg.mxu0
        %892 = vrot.lane.b32.xlu0 %v838, 96
        %v893 = vpop.permute.xlu0 %892
        %v895 = vsel %vm844, %v838, 0
        %v898 = vsel %vm844, %v893, 0
        %900 = vmatprep.subr.bf16.mxu0 0
        %901 = vmatpush1.bf16.xpose.msra.mxu0 0
        %902 = vmatprep.subr.bf16.mxu0 0
        %903 = vmatpush1.bf16.xpose.msra.mxu0 0
        %904 = vmatprep.subr.bf16.mxu0 0
        %905 = vmatpush1.bf16.xpose.msra.mxu0 0
        %906 = vmatprep.subr.bf16.mxu0 0
        %907 = vmatpush1.bf16.xpose.msra.mxu0 0
        %908 = vmatprep.subr.bf16.mxu0 0
        %909 = vmatpush1.bf16.xpose.msra.mxu0 0
        %910 = vmatprep.subr.bf16.mxu0 0
        %911 = vmatpush1.bf16.xpose.msra.mxu0 0
        %912 = vmatprep.subr.bf16.mxu0 0
        %913 = vmatpush1.bf16.xpose.msra.mxu0 0
        %914 = vmatprep.subr.bf16.mxu0 0
        %915 = vmatpush1.bf16.xpose.msra.mxu0 %v898
        %916 = vmatprep.subr.bf16.mxu0 0
        %917 = vmatpush2.bf16.xpose.msra.mxu0 0
        %918 = vmatprep.subr.bf16.mxu0 0
        %919 = vmatpush2.bf16.xpose.msra.mxu0 0
        %920 = vmatprep.subr.bf16.mxu0 0
        %921 = vmatpush2.bf16.xpose.msra.mxu0 0
        %922 = vmatprep.subr.bf16.mxu0 0
        %923 = vmatpush2.bf16.xpose.msra.mxu0 0
        %924 = vmatprep.subr.bf16.mxu0 0
        %925 = vmatpush2.bf16.xpose.msra.mxu0 0
        %926 = vmatprep.subr.bf16.mxu0 0
        %927 = vmatpush2.bf16.xpose.msra.mxu0 0
        %928 = vmatprep.subr.bf16.mxu0 0
        %929 = vmatpush2.bf16.xpose.msra.mxu0 0
        %930 = vmatprep.subr.bf16.mxu0 0
        %931 = vmatpush2.bf16.xpose.msra.mxu0 0
        %932 = vmatprep.mubr.bf16.mxu0 0
        %933 = vmatmul.mubr.bf16.gmra.mxu0 %v895
        %v934 = vpop.f32.mrf.mxu0
        %v935 = vadd.f32 0.0, %v934
        %v936 = vpop.f32.mrf.mxu0
        %v937 = vpop.f32.mrf.mxu0
        %v938 = vpop.f32.mrf.mxu0
        %939 = vdwg.mxu0
        %941 = vrot.lane.b32.xlu0 %v839, 96
        %v942 = vpop.permute.xlu0 %941
        %v944 = vsel %vm844, %v839, 0
        %v947 = vsel %vm844, %v942, 0
        %949 = vmatprep.subr.bf16.mxu0 0
        %950 = vmatpush1.bf16.xpose.msra.mxu0 0
        %951 = vmatprep.subr.bf16.mxu0 0
        %952 = vmatpush1.bf16.xpose.msra.mxu0 0
        %953 = vmatprep.subr.bf16.mxu0 0
        %954 = vmatpush1.bf16.xpose.msra.mxu0 0
        %955 = vmatprep.subr.bf16.mxu0 0
        %956 = vmatpush1.bf16.xpose.msra.mxu0 0
        %957 = vmatprep.subr.bf16.mxu0 0
        %958 = vmatpush1.bf16.xpose.msra.mxu0 0
        %959 = vmatprep.subr.bf16.mxu0 0
        %960 = vmatpush1.bf16.xpose.msra.mxu0 0
        %961 = vmatprep.subr.bf16.mxu0 0
        %962 = vmatpush1.bf16.xpose.msra.mxu0 0
        %963 = vmatprep.subr.bf16.mxu0 0
        %964 = vmatpush1.bf16.xpose.msra.mxu0 %v947
        %965 = vmatprep.subr.bf16.mxu0 0
        %966 = vmatpush2.bf16.xpose.msra.mxu0 0
        %967 = vmatprep.subr.bf16.mxu0 0
        %968 = vmatpush2.bf16.xpose.msra.mxu0 0
        %969 = vmatprep.subr.bf16.mxu0 0
        %970 = vmatpush2.bf16.xpose.msra.mxu0 0
        %971 = vmatprep.subr.bf16.mxu0 0
        %972 = vmatpush2.bf16.xpose.msra.mxu0 0
        %973 = vmatprep.subr.bf16.mxu0 0
        %974 = vmatpush2.bf16.xpose.msra.mxu0 0
        %975 = vmatprep.subr.bf16.mxu0 0
        %976 = vmatpush2.bf16.xpose.msra.mxu0 0
        %977 = vmatprep.subr.bf16.mxu0 0
        %978 = vmatpush2.bf16.xpose.msra.mxu0 0
        %979 = vmatprep.subr.bf16.mxu0 0
        %980 = vmatpush2.bf16.xpose.msra.mxu0 0
        %981 = vmatprep.mubr.bf16.mxu0 0
        %982 = vmatmul.mubr.bf16.gmra.mxu0 %v944
        %v983 = vpop.f32.mrf.mxu0
        %v984 = vadd.f32 0.0, %v983
        %v985 = vpop.f32.mrf.mxu0
        %v986 = vpop.f32.mrf.mxu0
        %v987 = vpop.f32.mrf.mxu0
        %988 = vdwg.mxu0
        %990 = vrot.lane.b32.xlu0 %v840, 96
        %v991 = vpop.permute.xlu0 %990
        %v993 = vsel %vm844, %v840, 0
        %v996 = vsel %vm844, %v991, 0
        %998 = vmatprep.subr.bf16.mxu0 0
        %999 = vmatpush1.bf16.xpose.msra.mxu0 0
        %1000 = vmatprep.subr.bf16.mxu0 0
        %1001 = vmatpush1.bf16.xpose.msra.mxu0 0
        %1002 = vmatprep.subr.bf16.mxu0 0
        %1003 = vmatpush1.bf16.xpose.msra.mxu0 0
        %1004 = vmatprep.subr.bf16.mxu0 0
        %1005 = vmatpush1.bf16.xpose.msra.mxu0 0
        %1006 = vmatprep.subr.bf16.mxu0 0
        %1007 = vmatpush1.bf16.xpose.msra.mxu0 0
        %1008 = vmatprep.subr.bf16.mxu0 0
        %1009 = vmatpush1.bf16.xpose.msra.mxu0 0
        %1010 = vmatprep.subr.bf16.mxu0 0
        %1011 = vmatpush1.bf16.xpose.msra.mxu0 0
        %1012 = vmatprep.subr.bf16.mxu0 0
        %1013 = vmatpush1.bf16.xpose.msra.mxu0 %v996
        %1014 = vmatprep.subr.bf16.mxu0 0
        %1015 = vmatpush2.bf16.xpose.msra.mxu0 0
        %1016 = vmatprep.subr.bf16.mxu0 0
        %1017 = vmatpush2.bf16.xpose.msra.mxu0 0
        %1018 = vmatprep.subr.bf16.mxu0 0
        %1019 = vmatpush2.bf16.xpose.msra.mxu0 0
        %1020 = vmatprep.subr.bf16.mxu0 0
        %1021 = vmatpush2.bf16.xpose.msra.mxu0 0
        %1022 = vmatprep.subr.bf16.mxu0 0
        %1023 = vmatpush2.bf16.xpose.msra.mxu0 0
        %1024 = vmatprep.subr.bf16.mxu0 0
        %1025 = vmatpush2.bf16.xpose.msra.mxu0 0
        %1026 = vmatprep.subr.bf16.mxu0 0
        %1027 = vmatpush2.bf16.xpose.msra.mxu0 0
        %1028 = vmatprep.subr.bf16.mxu0 0
        %1029 = vmatpush2.bf16.xpose.msra.mxu0 0
        %1030 = vmatprep.mubr.bf16.mxu0 0
        %1031 = vmatmul.mubr.bf16.gmra.mxu0 %v993
        %v1032 = vpop.f32.mrf.mxu0
        %v1033 = vadd.f32 0.0, %v1032
        %v1034 = vpop.f32.mrf.mxu0
        %v1035 = vpop.f32.mrf.mxu0
        %v1036 = vpop.f32.mrf.mxu0
        %1037 = vdwg.mxu0
        %v1038 = vsel %vm844, %v886, -inf
        %1039 = vmax.xlane.f32.xlu0 %v1038
        %v1040 = vpop.xlane.xlu0 %1039
        %v1041 = vsel %vm844, %v935, -inf
        %1042 = vmax.xlane.f32.xlu0 %v1041
        %v1043 = vpop.xlane.xlu0 %1042
        %v1044 = vsel %vm844, %v984, -inf
        %1045 = vmax.xlane.f32.xlu0 %v1044
        %v1046 = vpop.xlane.xlu0 %1045
        %v1047 = vsel %vm844, %v1033, -inf
        %1048 = vmax.xlane.f32.xlu0 %v1047
        %v1049 = vpop.xlane.xlu0 %1048
        %v1050 = vsub.f32 %v886, %v1040
        %v1051 = vsub.f32 %v935, %v1043
        %v1052 = vsub.f32 %v984, %v1046
        %v1053 = vsub.f32 %v1033, %v1049
        %v1054 = vmul.f32 %v1050, 1.442695
        %v1055 = vpow.pop %v1054
        %v1056 = vmul.f32 %v1051, 1.442695
        %v1057 = vpow.pop %v1056
        %v1058 = vmul.f32 %v1052, 1.442695
        %v1059 = vpow.pop %v1058
        %v1060 = vmul.f32 %v1053, 1.442695
        %v1061 = vpow.pop %v1060
        %v1062 = vsel %vm844, %v1055, 0.0
        %1063 = vadd.xlane.f32.xlu0 %v1062
        %v1064 = vpop.xlane.xlu0 %1063
        %v1065 = vsel %vm844, %v1057, 0.0
        %1066 = vadd.xlane.f32.xlu0 %v1065
        %v1067 = vpop.xlane.xlu0 %1066
        %v1068 = vsel %vm844, %v1059, 0.0
        %1069 = vadd.xlane.f32.xlu0 %v1068
        %v1070 = vpop.xlane.xlu0 %1069
        %v1071 = vsel %vm844, %v1061, 0.0
        %1072 = vadd.xlane.f32.xlu0 %v1071
        %v1073 = vpop.xlane.xlu0 %1072
        %v1074 = vrcp.pop %v1064
        %v1075 = vrcp.pop %v1067
        %v1076 = vrcp.pop %v1070
        %v1077 = vrcp.pop %v1073
        %v1078 = vmul.f32 %v1055, %v1074
        %v1079 = vmul.f32 %v1057, %v1075
        %v1080 = vmul.f32 %v1059, %v1076
        %v1081 = vmul.f32 %v1061, %v1077
        %1082 = vst.msk [vmem:[%s678] sm:$0xff] %vm844, %v1078
        %1083 = vst.msk [vmem:[%s678 + $0x8] sm:$0xff] %vm844, %v1079
        %1084 = vst.msk [vmem:[%s678 + $0x10] sm:$0xff] %vm844, %v1080
        %1085 = vst.msk [vmem:[%s678 + $0x18] sm:$0xff] %vm844, %v1081
        %v1086 = vpack.c.bf16 %v1078, %v1078
        %v1087 = vpack.c.bf16 %v1079, %v1079
        %v1088 = vpack.c.bf16 %v1080, %v1080
        %v1089 = vpack.c.bf16 %v1081, %v1081
        %1090 = vrot.lane.b32.xlu0 %v837, 64
        %v1091 = vpop.permute.xlu0 %1090
        %v1093 = vsel %vm844, %v1086, 0
        %vm1095 = vcmask 1043456
        %v1097 = vsel %vm1095, %v1091, 0
        %1099 = vmatprep.subr.bf16.mxu0 0
        %1100 = vmatpush1.bf16.msra.mxu0 0
        %1101 = vmatprep.subr.bf16.mxu0 0
        %1102 = vmatpush1.bf16.msra.mxu0 0
        %1103 = vmatprep.subr.bf16.mxu0 0
        %1104 = vmatpush1.bf16.msra.mxu0 0
        %1105 = vmatprep.subr.bf16.mxu0 0
        %1106 = vmatpush1.bf16.msra.mxu0 0
        %1107 = vmatprep.subr.bf16.mxu0 0
        %1108 = vmatpush1.bf16.msra.mxu0 0
        %1109 = vmatprep.subr.bf16.mxu0 0
        %1110 = vmatpush1.bf16.msra.mxu0 0
        %1111 = vmatprep.subr.bf16.mxu0 0
        %1112 = vmatpush1.bf16.msra.mxu0 0
        %1113 = vmatprep.subr.bf16.mxu0 0
        %1114 = vmatpush1.bf16.msra.mxu0 %v1097
        %1115 = vmatprep.subr.bf16.mxu0 0
        %1116 = vmatpush2.bf16.msra.mxu0 0
        %1117 = vmatprep.subr.bf16.mxu0 0
        %1118 = vmatpush2.bf16.msra.mxu0 0
        %1119 = vmatprep.subr.bf16.mxu0 0
        %1120 = vmatpush2.bf16.msra.mxu0 0
        %1121 = vmatprep.subr.bf16.mxu0 0
        %1122 = vmatpush2.bf16.msra.mxu0 0
        %1123 = vmatprep.subr.bf16.mxu0 0
        %1124 = vmatpush2.bf16.msra.mxu0 0
        %1125 = vmatprep.subr.bf16.mxu0 0
        %1126 = vmatpush2.bf16.msra.mxu0 0
        %1127 = vmatprep.subr.bf16.mxu0 0
        %1128 = vmatpush2.bf16.msra.mxu0 0
        %1129 = vmatprep.subr.bf16.mxu0 0
        %1130 = vmatpush2.bf16.msra.mxu0 0
        %1131 = vmatprep.mubr.bf16.mxu0 0
        %1132 = vmatmul.mubr.bf16.gmra.mxu0 %v1093
        %v1133 = vpop.f32.mrf.mxu0
        %v1134 = vadd.f32 0.0, %v1133
        %v1135 = vpop.f32.mrf.mxu0
        %v1136 = vpop.f32.mrf.mxu0
        %v1137 = vpop.f32.mrf.mxu0
        %1138 = vdwg.mxu0
        %1139 = vrot.lane.b32.xlu0 %v838, 64
        %v1140 = vpop.permute.xlu0 %1139
        %v1142 = vsel %vm844, %v1087, 0
        %v1145 = vsel %vm1095, %v1140, 0
        %1147 = vmatprep.subr.bf16.mxu0 0
        %1148 = vmatpush1.bf16.msra.mxu0 0
        %1149 = vmatprep.subr.bf16.mxu0 0
        %1150 = vmatpush1.bf16.msra.mxu0 0
        %1151 = vmatprep.subr.bf16.mxu0 0
        %1152 = vmatpush1.bf16.msra.mxu0 0
        %1153 = vmatprep.subr.bf16.mxu0 0
        %1154 = vmatpush1.bf16.msra.mxu0 0
        %1155 = vmatprep.subr.bf16.mxu0 0
        %1156 = vmatpush1.bf16.msra.mxu0 0
        %1157 = vmatprep.subr.bf16.mxu0 0
        %1158 = vmatpush1.bf16.msra.mxu0 0
        %1159 = vmatprep.subr.bf16.mxu0 0
        %1160 = vmatpush1.bf16.msra.mxu0 0
        %1161 = vmatprep.subr.bf16.mxu0 0
        %1162 = vmatpush1.bf16.msra.mxu0 %v1145
        %1163 = vmatprep.subr.bf16.mxu0 0
        %1164 = vmatpush2.bf16.msra.mxu0 0
        %1165 = vmatprep.subr.bf16.mxu0 0
        %1166 = vmatpush2.bf16.msra.mxu0 0
        %1167 = vmatprep.subr.bf16.mxu0 0
        %1168 = vmatpush2.bf16.msra.mxu0 0
        %1169 = vmatprep.subr.bf16.mxu0 0
        %1170 = vmatpush2.bf16.msra.mxu0 0
        %1171 = vmatprep.subr.bf16.mxu0 0
        %1172 = vmatpush2.bf16.msra.mxu0 0
        %1173 = vmatprep.subr.bf16.mxu0 0
        %1174 = vmatpush2.bf16.msra.mxu0 0
        %1175 = vmatprep.subr.bf16.mxu0 0
        %1176 = vmatpush2.bf16.msra.mxu0 0
        %1177 = vmatprep.subr.bf16.mxu0 0
        %1178 = vmatpush2.bf16.msra.mxu0 0
        %1179 = vmatprep.mubr.bf16.mxu0 0
        %1180 = vmatmul.mubr.bf16.gmra.mxu0 %v1142
        %v1181 = vpop.f32.mrf.mxu0
        %v1182 = vadd.f32 0.0, %v1181
        %v1183 = vpop.f32.mrf.mxu0
        %v1184 = vpop.f32.mrf.mxu0
        %v1185 = vpop.f32.mrf.mxu0
        %1186 = vdwg.mxu0
        %1187 = vrot.lane.b32.xlu0 %v839, 64
        %v1188 = vpop.permute.xlu0 %1187
        %v1190 = vsel %vm844, %v1088, 0
        %v1193 = vsel %vm1095, %v1188, 0
        %1195 = vmatprep.subr.bf16.mxu0 0
        %1196 = vmatpush1.bf16.msra.mxu0 0
        %1197 = vmatprep.subr.bf16.mxu0 0
        %1198 = vmatpush1.bf16.msra.mxu0 0
        %1199 = vmatprep.subr.bf16.mxu0 0
        %1200 = vmatpush1.bf16.msra.mxu0 0
        %1201 = vmatprep.subr.bf16.mxu0 0
        %1202 = vmatpush1.bf16.msra.mxu0 0
        %1203 = vmatprep.subr.bf16.mxu0 0
        %1204 = vmatpush1.bf16.msra.mxu0 0
        %1205 = vmatprep.subr.bf16.mxu0 0
        %1206 = vmatpush1.bf16.msra.mxu0 0
        %1207 = vmatprep.subr.bf16.mxu0 0
        %1208 = vmatpush1.bf16.msra.mxu0 0
        %1209 = vmatprep.subr.bf16.mxu0 0
        %1210 = vmatpush1.bf16.msra.mxu0 %v1193
        %1211 = vmatprep.subr.bf16.mxu0 0
        %1212 = vmatpush2.bf16.msra.mxu0 0
        %1213 = vmatprep.subr.bf16.mxu0 0
        %1214 = vmatpush2.bf16.msra.mxu0 0
        %1215 = vmatprep.subr.bf16.mxu0 0
        %1216 = vmatpush2.bf16.msra.mxu0 0
        %1217 = vmatprep.subr.bf16.mxu0 0
        %1218 = vmatpush2.bf16.msra.mxu0 0
        %1219 = vmatprep.subr.bf16.mxu0 0
        %1220 = vmatpush2.bf16.msra.mxu0 0
        %1221 = vmatprep.subr.bf16.mxu0 0
        %1222 = vmatpush2.bf16.msra.mxu0 0
        %1223 = vmatprep.subr.bf16.mxu0 0
        %1224 = vmatpush2.bf16.msra.mxu0 0
        %1225 = vmatprep.subr.bf16.mxu0 0
        %1226 = vmatpush2.bf16.msra.mxu0 0
        %1227 = vmatprep.mubr.bf16.mxu0 0
        %1228 = vmatmul.mubr.bf16.gmra.mxu0 %v1190
        %v1229 = vpop.f32.mrf.mxu0
        %v1230 = vadd.f32 0.0, %v1229
        %v1231 = vpop.f32.mrf.mxu0
        %v1232 = vpop.f32.mrf.mxu0
        %v1233 = vpop.f32.mrf.mxu0
        %1234 = vdwg.mxu0
        %1235 = vrot.lane.b32.xlu0 %v840, 64
        %v1236 = vpop.permute.xlu0 %1235
        %v1238 = vsel %vm844, %v1089, 0
        %v1241 = vsel %vm1095, %v1236, 0
        %1243 = vmatprep.subr.bf16.mxu0 0
        %1244 = vmatpush1.bf16.msra.mxu0 0
        %1245 = vmatprep.subr.bf16.mxu0 0
        %1246 = vmatpush1.bf16.msra.mxu0 0
        %1247 = vmatprep.subr.bf16.mxu0 0
        %1248 = vmatpush1.bf16.msra.mxu0 0
        %1249 = vmatprep.subr.bf16.mxu0 0
        %1250 = vmatpush1.bf16.msra.mxu0 0
        %1251 = vmatprep.subr.bf16.mxu0 0
        %1252 = vmatpush1.bf16.msra.mxu0 0
        %1253 = vmatprep.subr.bf16.mxu0 0
        %1254 = vmatpush1.bf16.msra.mxu0 0
        %1255 = vmatprep.subr.bf16.mxu0 0
        %1256 = vmatpush1.bf16.msra.mxu0 0
        %1257 = vmatprep.subr.bf16.mxu0 0
        %1258 = vmatpush1.bf16.msra.mxu0 %v1241
        %1259 = vmatprep.subr.bf16.mxu0 0
        %1260 = vmatpush2.bf16.msra.mxu0 0
        %1261 = vmatprep.subr.bf16.mxu0 0
        %1262 = vmatpush2.bf16.msra.mxu0 0
        %1263 = vmatprep.subr.bf16.mxu0 0
        %1264 = vmatpush2.bf16.msra.mxu0 0
        %1265 = vmatprep.subr.bf16.mxu0 0
        %1266 = vmatpush2.bf16.msra.mxu0 0
        %1267 = vmatprep.subr.bf16.mxu0 0
        %1268 = vmatpush2.bf16.msra.mxu0 0
        %1269 = vmatprep.subr.bf16.mxu0 0
        %1270 = vmatpush2.bf16.msra.mxu0 0
        %1271 = vmatprep.subr.bf16.mxu0 0
        %1272 = vmatpush2.bf16.msra.mxu0 0
        %1273 = vmatprep.subr.bf16.mxu0 0
        %1274 = vmatpush2.bf16.msra.mxu0 0
        %1275 = vmatprep.mubr.bf16.mxu0 0
        %1276 = vmatmul.mubr.bf16.gmra.mxu0 %v1238
        %v1277 = vpop.f32.mrf.mxu0
        %v1278 = vadd.f32 0.0, %v1277
        %v1279 = vpop.f32.mrf.mxu0
        %v1280 = vpop.f32.mrf.mxu0
        %v1281 = vpop.f32.mrf.mxu0
        %1282 = vdwg.mxu0
        %1284 = vrot.lane.b32.xlu0 %v1182, 8
        %v1285 = vpop.permute.xlu0 %1284
        %1288 = vrot.lane.b32.xlu0 %v1230, 16
        %v1289 = vpop.permute.xlu0 %1288
        %1292 = vrot.lane.b32.xlu0 %v1278, 24
        %v1293 = vpop.permute.xlu0 %1292
        %v1295 = vsel %vm844, %v1134, %v1285
        %vm1296 = vcmask 130048
        %v1297 = vsel %vm1296, %v1295, %v1289
        %vm1298 = vcmask 195584
        %v1299 = vsel %vm1298, %v1297, %v1293
        %v1300 = vpack.c.bf16 %v1299, %v1299
        %v1301 = vld [vmem:[%s694] sm:$0xf]
        %v1302 = vld [vmem:[%s694 + $0x4] sm:$0xf]
        %v1303 = vld [vmem:[%s694 + $0x8] sm:$0xf]
        %v1304 = vld [vmem:[%s694 + $0xc] sm:$0xf]
        %v1305 = vld [vmem:[%s697] sm:$0x1]
        %v1307 = vlaneseq
        %v1308 = vshrl.u32 %v1307, 7
        %v1309 = vsub.s32 0, %v1308
        %v1310 = vrot.slane %v1305, %v1309
        %v1316 = vunpack.c.l.b16 %v1301
        %v1317 = vunpack.c.l.b16 %v1302
        %v1318 = vunpack.c.l.b16 %v1303
        %v1319 = vunpack.c.l.b16 %v1304
        %v1320 = vpack.c.b16 %v1317, %v1316
        %v1321 = vpack.c.b16 %v1319, %v1318
        %v1325 = vsel %vm731, %v1300, 0
        %1327 = vmatprep.subr.bf16.mxu0 0
        %1328 = vmatpush1.bf16.msra.mxu0 0
        %1329 = vmatprep.subr.bf16.mxu0 0
        %1330 = vmatpush1.bf16.msra.mxu0 0
        %1331 = vmatprep.subr.bf16.mxu0 0
        %1332 = vmatpush1.bf16.msra.mxu0 0
        %1333 = vmatprep.subr.bf16.mxu0 0
        %1334 = vmatpush1.bf16.msra.mxu0 0
        %1335 = vmatprep.subr.bf16.mxu0 0
        %1336 = vmatpush1.bf16.msra.mxu0 0
        %1337 = vmatprep.subr.bf16.mxu0 0
        %1338 = vmatpush1.bf16.msra.mxu0 0
        %1339 = vmatprep.subr.bf16.mxu0 0
        %1340 = vmatpush1.bf16.msra.mxu0 %v1321
        %1341 = vmatprep.subr.bf16.mxu0 0
        %1342 = vmatpush1.bf16.msra.mxu0 %v1320
        %1343 = vmatprep.subr.bf16.mxu0 0
        %1344 = vmatpush2.bf16.msra.mxu0 0
        %1345 = vmatprep.subr.bf16.mxu0 0
        %1346 = vmatpush2.bf16.msra.mxu0 0
        %1347 = vmatprep.subr.bf16.mxu0 0
        %1348 = vmatpush2.bf16.msra.mxu0 0
        %1349 = vmatprep.subr.bf16.mxu0 0
        %1350 = vmatpush2.bf16.msra.mxu0 0
        %1351 = vmatprep.subr.bf16.mxu0 0
        %1352 = vmatpush2.bf16.msra.mxu0 0
        %1353 = vmatprep.subr.bf16.mxu0 0
        %1354 = vmatpush2.bf16.msra.mxu0 0
        %1355 = vmatprep.subr.bf16.mxu0 0
        %1356 = vmatpush2.bf16.msra.mxu0 0
        %1357 = vmatprep.subr.bf16.mxu0 0
        %1358 = vmatpush2.bf16.msra.mxu0 0
        %1359 = vmatprep.mubr.bf16.mxu0 0
        %1360 = vmatmul.mubr.bf16.gmra.mxu0 %v1325
        %v1361 = vpop.f32.mrf.mxu0
        %v1362 = vadd.f32 %v1310, %v1361
        %v1363 = vpop.f32.mrf.mxu0
        %v1364 = vpop.f32.mrf.mxu0
        %v1365 = vpop.f32.mrf.mxu0
        %1366 = vdwg.mxu0
        %v1367 = vadd.f32 %v728, %v1362
        %v1368 = vld [vmem:[%s700] sm:$0x1]
        %v1369 = vld [vmem:[%s703] sm:$0x1]
        %v1370 = vsel %vm731, %v1367, 0.0
        %1371 = vadd.xlane.f32.xlu0 %v1370
        %v1372 = vpop.xlane.xlu0 %1371
        %v1373 = vmul.f32 %v1372, %v735
        %v1374 = vsub.f32 %v1367, %v1373
        %v1375 = vmul.f32 %v1374, %v1374
        %v1376 = vsel %vm731, %v1375, 0.0
        %1377 = vadd.xlane.f32.xlu0 %v1376
        %v1378 = vpop.xlane.xlu0 %1377
        %v1379 = vmul.f32 %v1378, %v735
        %v1380 = vadd.f32 %v1379, 1e-06
        %v1381 = vrsqrt.pop %v1380
        %v1382 = vmul.f32 %v1374, %v1381
        %v1384 = vlaneseq
        %v1385 = vshrl.u32 %v1384, 7
        %v1386 = vsub.s32 0, %v1385
        %v1387 = vrot.slane %v1368, %v1386
        %v1389 = vmul.f32 %v1382, %v1387
        %v1391 = vlaneseq
        %v1392 = vshrl.u32 %v1391, 7
        %v1393 = vsub.s32 0, %v1392
        %v1394 = vrot.slane %v1369, %v1393
        %v1396 = vadd.f32 %v1389, %v1394
        %v1397 = vpack.c.bf16 %v1396, %v1396
        %v1398 = vld [vmem:[%s708] sm:$0xf]
        %v1399 = vld [vmem:[%s708 + $0x4] sm:$0xf]
        %v1400 = vld [vmem:[%s708 + $0x8] sm:$0xf]
        %v1401 = vld [vmem:[%s708 + $0xc] sm:$0xf]
        %v1402 = vld [vmem:[%s711] sm:$0x1]
        %v1404 = vlaneseq
        %v1405 = vshrl.u32 %v1404, 7
        %v1406 = vsub.s32 0, %v1405
        %v1407 = vrot.slane %v1402, %v1406
        %v1413 = vunpack.c.l.b16 %v1398
        %v1414 = vunpack.c.l.b16 %v1399
        %v1415 = vunpack.c.l.b16 %v1400
        %v1416 = vunpack.c.l.b16 %v1401
        %v1417 = vpack.c.b16 %v1414, %v1413
        %v1418 = vpack.c.b16 %v1416, %v1415
        %v1422 = vsel %vm731, %v1397, 0
        %1424 = vmatprep.subr.bf16.mxu0 0
        %1425 = vmatpush1.bf16.msra.mxu0 0
        %1426 = vmatprep.subr.bf16.mxu0 0
        %1427 = vmatpush1.bf16.msra.mxu0 0
        %1428 = vmatprep.subr.bf16.mxu0 0
        %1429 = vmatpush1.bf16.msra.mxu0 0
        %1430 = vmatprep.subr.bf16.mxu0 0
        %1431 = vmatpush1.bf16.msra.mxu0 0
        %1432 = vmatprep.subr.bf16.mxu0 0
        %1433 = vmatpush1.bf16.msra.mxu0 0
        %1434 = vmatprep.subr.bf16.mxu0 0
        %1435 = vmatpush1.bf16.msra.mxu0 0
        %1436 = vmatprep.subr.bf16.mxu0 0
        %1437 = vmatpush1.bf16.msra.mxu0 %v1418
        %1438 = vmatprep.subr.bf16.mxu0 0
        %1439 = vmatpush1.bf16.msra.mxu0 %v1417
        %1440 = vmatprep.subr.bf16.mxu0 0
        %1441 = vmatpush2.bf16.msra.mxu0 0
        %1442 = vmatprep.subr.bf16.mxu0 0
        %1443 = vmatpush2.bf16.msra.mxu0 0
        %1444 = vmatprep.subr.bf16.mxu0 0
        %1445 = vmatpush2.bf16.msra.mxu0 0
        %1446 = vmatprep.subr.bf16.mxu0 0
        %1447 = vmatpush2.bf16.msra.mxu0 0
        %1448 = vmatprep.subr.bf16.mxu0 0
        %1449 = vmatpush2.bf16.msra.mxu0 0
        %1450 = vmatprep.subr.bf16.mxu0 0
        %1451 = vmatpush2.bf16.msra.mxu0 0
        %1452 = vmatprep.subr.bf16.mxu0 0
        %1453 = vmatpush2.bf16.msra.mxu0 0
        %1454 = vmatprep.subr.bf16.mxu0 0
        %1455 = vmatpush2.bf16.msra.mxu0 0
        %1456 = vmatprep.mubr.bf16.mxu0 0
        %1457 = vmatmul.mubr.bf16.gmra.mxu0 %v1422
        %v1458 = vpop.f32.mrf.mxu0
        %v1459 = vadd.f32 %v1407, %v1458
        %v1460 = vpop.f32.mrf.mxu0
        %v1461 = vpop.f32.mrf.mxu0
        %v1462 = vpop.f32.mrf.mxu0
        %1463 = vdwg.mxu0
        %v1464 = vmul.f32 %v1459, 0.5
        %v1465 = vmul.f32 %v1459, 0.70710677
        %v1466 = vand.u32 2147483647, %v1465
        %v1467 = vmul.f32 %v1466, 0.3275911
        %v1468 = vadd.f32 %v1467, 1.0
        %v1469 = vrcp.pop %v1468
        %v1470 = vmul.f32 1.0, %v1469
        %v1471 = vmul.f32 %v1470, 1.0614054
        %v1472 = vadd.f32 %v1471, -1.4531521
        %v1473 = vmul.f32 %v1470, %v1472
        %v1474 = vadd.f32 %v1473, 1.4214138
        %v1475 = vmul.f32 %v1470, %v1474
        %v1476 = vadd.f32 %v1475, -0.28449672
        %v1477 = vmul.f32 %v1470, %v1476
        %v1478 = vadd.f32 %v1477, 0.2548296
        %v1479 = vmul.f32 %v1470, %v1478
        %v1480 = vsub.f32 0.0, %v1466
        %v1481 = vmul.f32 %v1480, %v1466
        %v1482 = vmul.f32 %v1481, 1.442695
        %v1483 = vpow.pop %v1482
        %v1484 = vmul.f32 %v1479, %v1483
        %v1485 = vsub.f32 1.0, %v1484
        %vm1486 = vcmp.ge.f32.partialorder %v1465, 0.0
        %v1487 = vsub.f32 0.0, %v1485
        %v1488 = vsel %vm1486, %v1485, %v1487
        %v1489 = vadd.f32 %v1488, 1.0
        %v1490 = vmul.f32 %v1464, %v1489
        %v1491 = vpack.c.bf16 %v1490, %v1490
        %v1492 = vld [vmem:[%s716] sm:$0xf]
        %v1493 = vld [vmem:[%s716 + $0x4] sm:$0xf]
        %v1494 = vld [vmem:[%s716 + $0x8] sm:$0xf]
        %v1495 = vld [vmem:[%s716 + $0xc] sm:$0xf]
        %v1496 = vld [vmem:[%s716 + $0x10] sm:$0xf]
        %v1497 = vld [vmem:[%s716 + $0x14] sm:$0xf]
        %v1498 = vld [vmem:[%s716 + $0x18] sm:$0xf]
        %v1499 = vld [vmem:[%s716 + $0x1c] sm:$0xf]
        %v1500 = vld [vmem:[%s719] sm:$0x1]
        %v1502 = vlaneseq
        %v1503 = vshrl.u32 %v1502, 7
        %v1504 = vsub.s32 0, %v1503
        %v1505 = vrot.slane %v1500, %v1504
        %v1515 = vunpack.c.l.b16 %v1492
        %v1516 = vunpack.c.l.b16 %v1493
        %v1517 = vunpack.c.l.b16 %v1494
        %v1518 = vunpack.c.l.b16 %v1495
        %v1519 = vunpack.c.l.b16 %v1496
        %v1520 = vunpack.c.l.b16 %v1497
        %v1521 = vunpack.c.l.b16 %v1498
        %v1522 = vunpack.c.l.b16 %v1499
        %v1523 = vpack.c.b16 %v1516, %v1515
        %v1524 = vpack.c.b16 %v1518, %v1517
        %v1525 = vpack.c.b16 %v1520, %v1519
        %v1526 = vpack.c.b16 %v1522, %v1521
        %vm1531 = vcmask 523264
        %v1533 = vsel %vm1531, %v1491, 0
        %1535 = vmatprep.subr.bf16.mxu0 0
        %1536 = vmatpush1.bf16.msra.mxu0 0
        %1537 = vmatprep.subr.bf16.mxu0 0
        %1538 = vmatpush1.bf16.msra.mxu0 0
        %1539 = vmatprep.subr.bf16.mxu0 0
        %1540 = vmatpush1.bf16.msra.mxu0 0
        %1541 = vmatprep.subr.bf16.mxu0 0
        %1542 = vmatpush1.bf16.msra.mxu0 0
        %1543 = vmatprep.subr.bf16.mxu0 0
        %1544 = vmatpush1.bf16.msra.mxu0 %v1526
        %1545 = vmatprep.subr.bf16.mxu0 0
        %1546 = vmatpush1.bf16.msra.mxu0 %v1525
        %1547 = vmatprep.subr.bf16.mxu0 0
        %1548 = vmatpush1.bf16.msra.mxu0 %v1524
        %1549 = vmatprep.subr.bf16.mxu0 0
        %1550 = vmatpush1.bf16.msra.mxu0 %v1523
        %1551 = vmatprep.subr.bf16.mxu0 0
        %1552 = vmatpush2.bf16.msra.mxu0 0
        %1553 = vmatprep.subr.bf16.mxu0 0
        %1554 = vmatpush2.bf16.msra.mxu0 0
        %1555 = vmatprep.subr.bf16.mxu0 0
        %1556 = vmatpush2.bf16.msra.mxu0 0
        %1557 = vmatprep.subr.bf16.mxu0 0
        %1558 = vmatpush2.bf16.msra.mxu0 0
        %1559 = vmatprep.subr.bf16.mxu0 0
        %1560 = vmatpush2.bf16.msra.mxu0 0
        %1561 = vmatprep.subr.bf16.mxu0 0
        %1562 = vmatpush2.bf16.msra.mxu0 0
        %1563 = vmatprep.subr.bf16.mxu0 0
        %1564 = vmatpush2.bf16.msra.mxu0 0
        %1565 = vmatprep.subr.bf16.mxu0 0
        %1566 = vmatpush2.bf16.msra.mxu0 0
        %1567 = vmatprep.mubr.bf16.mxu0 0
        %1568 = vmatmul.mubr.bf16.gmra.mxu0 %v1533
        %v1569 = vpop.f32.mrf.mxu0
        %v1570 = vadd.f32 %v1505, %v1569
        %v1571 = vpop.f32.mrf.mxu0
        %v1572 = vpop.f32.mrf.mxu0
        %v1573 = vpop.f32.mrf.mxu0
        %1574 = vdwg.mxu0
        %v1575 = vadd.f32 %v1367, %v1570
        %1576 = vst.msk [vmem:[#allocation2] sm:$0xff] %vm731, %v1575
        %p1577 = scmp.eq.s32.totalorder %s43, 1
        // Predicated region
        $region85: #{tpu_custom_call.1} parent=71 // pred_check
          %p1578 = pneg %p1577
        $region86: #{tpu_custom_call.1} parent=71 // pred_check_branch
          %1580 = sbr.rel (%p1578) target = $region88
        $region87: #{tpu_custom_call.1} parent=71 // pred_region
          %1581 = vst.msk [vmem:[%s671] sm:$0xff] %vm731, %v1575
        $region88: #{tpu_custom_call.1} parent=71 // pred_fallthru
          _
        %s1582 = sand.u32 %s396, 1
        %s1583 = scalar_lea.sflag [#allocation5], %s1582
        %s1584 = sand.u32 %s396, 1
        %s1585 = smul.addr %s1584, 8
        %s1586 = scalar_lea.vmem [#allocation8], %s1585
        %s1587 = sand.u32 %s424, 1
        %s1588 = scalar_lea.sflag [#allocation10], %s1587
        %s1589 = sand.u32 %s424, 1
        %s1590 = smul.addr %s1589, 32
        %s1591 = scalar_lea.vmem [#allocation9], %s1590
        // Predicated region
        $region89: #{tpu_custom_call.1} parent=71 // pred_check
          %p1592 = pneg %p406
        $region90: #{tpu_custom_call.1} parent=71 // pred_check_branch
          %1594 = sbr.rel (%p1592) target = $region92
        $region91: #{tpu_custom_call.1} parent=71 // pred_region
          %s1596 = ssub.s32 128, 128
          %1597 = vsyncadd %s1583, %s1596
          %s1598 = smul.addr %s42, 128
          %s1599 = scalar_lea.hbm %s13, %s1598
          %s1601 = sshll.u32 %s1586, 4
          %s1602 = int_to_ptr.vmem [resolvable:$true] %s1601
          %1604 = dma.vmem_to_hbm [thread:$0]  %s1602, 128, %s1599, %s1583
        $region92: #{tpu_custom_call.1} parent=71 // pred_fallthru
          _
        // Predicated region
        $region93: #{tpu_custom_call.1} parent=71 // pred_check
          %p1605 = pneg %p434
        $region94: #{tpu_custom_call.1} parent=71 // pred_check_branch
          %1607 = sbr.rel (%p1605) target = $region96
        $region95: #{tpu_custom_call.1} parent=71 // pred_region
          %s1609 = ssub.s32 512, 512
          %1610 = vsyncadd %s1588, %s1609
          %s1611 = smul.addr %s42, 4
          %s1612 = smul.addr %s43, 8
          %s1613 = sadd.s32 %s1611, %s1612
          %s1614 = smul.addr %s1613, 128
          %s1615 = scalar_lea.hbm %s14, %s1614
          %s1616 = sshll.u32 %s1591, 4
          %s1617 = int_to_ptr.vmem [resolvable:$true] %s1616
          %1622 = dma.vmem_to_hbm [thread:$0]  %s1617, 512, %s1615, %s1588, 128, 128, 8
        $region96: #{tpu_custom_call.1} parent=71 // pred_fallthru
          _
      $region72: #{tpu_custom_call.1} parent=5 // pred_fallthru
        _
      %p1623 = scmp.le.s32.totalorder 2, %s33
      // Predicated region
      $region97: #{tpu_custom_call.1} parent=5 // pred_check
        %p1624 = pneg %p1623
      $region98: #{tpu_custom_call.1} parent=5 // pred_check_branch
        %1626 = sbr.rel (%p1624) target = $region100
      $region99: #{tpu_custom_call.1} parent=5 // pred_region
        %s1627 = ssub.s32 %s33, 2
        // Predicated region
        $region101: #{tpu_custom_call.1} parent=99 // pred_check
          %p1628 = pneg %p412
        $region102: #{tpu_custom_call.1} parent=99 // pred_check_branch
          %1630 = sbr.rel (%p1628) target = $region104
        $region103: #{tpu_custom_call.1} parent=99 // pred_region
          %s1631 = sand.u32 %s397, 1
          %s1632 = scalar_lea.sflag [#allocation5], %s1631
          %s1633 = sand.u32 %s397, 1
          %s1634 = smul.addr %s1633, 8
          %s1635 = scalar_lea.vmem [#allocation8], %s1634
          %1636 = dma.done %s1632, 128
        $region104: #{tpu_custom_call.1} parent=99 // pred_fallthru
          _
        // Predicated region
        $region105: #{tpu_custom_call.1} parent=99 // pred_check
          %p1637 = pneg %p440
        $region106: #{tpu_custom_call.1} parent=99 // pred_check_branch
          %1639 = sbr.rel (%p1637) target = $region108
        $region107: #{tpu_custom_call.1} parent=99 // pred_region
          %s1640 = sand.u32 %s425, 1
          %s1641 = scalar_lea.sflag [#allocation10], %s1640
          %s1642 = sand.u32 %s425, 1
          %s1643 = smul.addr %s1642, 32
          %s1644 = scalar_lea.vmem [#allocation9], %s1643
          %1645 = dma.done %s1641, 512
        $region108: #{tpu_custom_call.1} parent=99 // pred_fallthru
          _
      $region100: #{tpu_custom_call.1} parent=5 // pred_fallthru
        _
    $region6: #{tpu_custom_call.1} parent=1 // loop_footer
      %s37 = sadd.s32 1, %s33
    $region7: #{tpu_custom_call.1} parent=1 // loop_footer_branch
      %32 = sbr.rel target = $region3
    $region8: #{tpu_custom_call.1} parent=1 // loop_exit
      _
    %1646 = vsyncpa [#allocation4], 1
    %s1647 = scalar_lea.sflag [#allocation4], 1
    %1648 = vsyncpa %s1647, 1
    %1649 = vsyncpa [#allocation7], 1
    %s1650 = scalar_lea.sflag [#allocation7], 1
    %1651 = vsyncpa %s1650, 1
    %1652 = vsyncpa [#allocation5], 1
    %s1653 = scalar_lea.sflag [#allocation5], 1
    %1654 = vsyncpa %s1653, 1
    %1655 = vsyncpa [#allocation10], 1
    %s1656 = scalar_lea.sflag [#allocation10], 1
    %1657 = vsyncpa %s1656, 1

</llo_original>
